<compile_context>
chip_gen: v7x
topology: tpu7x:2x2x1
jax: 0.10.0
libtpu: 0.0.40
codegen_flags: <defaults>
</compile_context>

<pallas_src>
import math
import functools
from typing import NamedTuple

import jax
import jax.numpy as jnp
from jax.experimental import pallas as pl
from jax.experimental.pallas import tpu as pltpu


def _round_up(x: int, m: int) -> int:
    return ((x + m - 1) // m) * m


def _cdiv(a: int, b: int) -> int:
    return -(-a // b)


_VOCAB_CHUNK = 512  # table rows consumed per in-kernel contraction chunk


def _vmem_limit_bytes() -> int:
    """Generation-aware scoped-VMEM limit (v7x: 64 MiB/TC, v5e/v6e: 128 MiB)."""
    try:
        kind = jax.devices()[0].device_kind.lower()
    except Exception:  # pragma: no cover
        kind = ""
    if "v7" in kind:
        return 48 * 1024 * 1024
    if "v5" in kind or "v6" in kind:
        return 96 * 1024 * 1024
    return 32 * 1024 * 1024  # conservative default (known-good on the sandbox)


class _TableMeta(NamedTuple):
    vocab: int     # original V
    emb: int       # original E
    k: int         # tokens packed per lane-dense output row
    v_pad: int     # padded vocab rows in the prepped table
    e_cols: int    # padded embedding cols in the prepped table
    vchunk: int    # in-kernel contraction chunk (== v_pad when not chunking)
    scale: float   # sqrt(emb_size)


def prepare_embedding_table(weight: jax.Array):
    """One-time table prep (pad V, maybe pad E). Build once, reuse every call."""
    V, E = weight.shape
    itemsize = jnp.dtype(weight.dtype).itemsize

    # Lane-dense output: pack k tokens per output row so the output block's
    # last dim is a multiple of 128 lanes (unmasked full-width stores).
    if E % 128 == 0:
        k, e_cols = 1, E
    elif 128 % E == 0 and E >= 8:
        k, e_cols = 128 // E, E
    else:
        # Fallback (E=48, E=96, E<8, ...): stay lane-dense by padding E up to
        # a multiple of 128 with zero columns (sliced off after the kernel).
        k, e_cols = 1, _round_up(E, 128)

    # Pad the vocab so the matmul contraction dim is 128-aligned / chunkable.
    v_pad = _round_up(V, 128)
    if v_pad > _VOCAB_CHUNK:
        v_pad = _round_up(V, _VOCAB_CHUNK)
        vchunk = _VOCAB_CHUNK
    else:
        vchunk = v_pad

    max_table_bytes = min(12 * 1024 * 1024, _vmem_limit_bytes() // 4)
    if v_pad * e_cols * itemsize > max_table_bytes:
        # TODO(synk): scalar-prefetched / manual-DMA HBM row gather for large
        # vocabularies (table left in HBM via memory_space=pl.ANY).
        raise NotImplementedError(
            "embedding table too large for the VMEM-resident one-hot path: "
            f"{v_pad * e_cols * itemsize} bytes after padding")

    if v_pad != V or e_cols != E:
        weight = jnp.pad(weight, ((0, v_pad - V), (0, e_cols - E)))
    return weight, _TableMeta(V, E, k, v_pad, e_cols, vchunk,
                              math.sqrt(float(E)))


def _token_embedding_kernel(tok_ref, w_ref, o_ref, *, scale, k, e_cols,
                            v_pad, vchunk, combine):
    # tok_ref : (r_tile, k)          int32 -- k tokens packed per output row
    # w_ref   : (v_pad, e_cols)      float -- single padded table (no kron)
    # o_ref   : (r_tile, k * e_cols) float -- lane-dense output block
    tok = tok_ref[...]
    rows = tok.shape[0]
    n_chunks = v_pad // vchunk
    w_dtype = w_ref.dtype

    if n_chunks == 1:
        # Small vocab: whole table in one MXU matmul per packed slot.
        col = jax.lax.broadcasted_iota(jnp.int32, (rows, v_pad), 1)
        parts = [
            jnp.dot((col == tok[:, j:j + 1]).astype(w_dtype), w_ref[...],
                    preferred_element_type=jnp.float32)
            for j in range(k)
        ]
    else:
        # Chunk the contraction (vocab) dim so the one-hot temporary stays
        # bounded no matter how large the token tile is.
        col = jax.lax.broadcasted_iota(jnp.int32, (rows, vchunk), 1)

        def body(c, parts):
            base = c * vchunk
            w_c = w_ref[pl.ds(pl.multiple_of(base, vchunk), vchunk), :]
            col_c = col + base
            return tuple(
                p + jnp.dot((col_c == tok[:, j:j + 1]).astype(w_dtype), w_c,
                            preferred_element_type=jnp.float32)
                for j, p in enumerate(parts))

        parts = jax.lax.fori_loop(
            0, n_chunks, body,
            tuple(jnp.zeros((rows, e_cols), jnp.float32) for _ in range(k)))

    if k == 1:
        o_ref[...] = (parts[0] * scale).astype(o_ref.dtype)
    elif combine == "concat":
        # Single unmasked full-width store of the lane-dense block.
        emb = jnp.concatenate(parts, axis=-1)
        o_ref[...] = (emb * scale).astype(o_ref.dtype)
    else:
        # Fallback combine: per-slot column stores (VMEM-local); the HBM
        # writeback of the output block is still full-width.
        for j, p in enumerate(parts):
            o_ref[:, j * e_cols:(j + 1) * e_cols] = (
                p * scale).astype(o_ref.dtype)


def token_embedding(tokens: jax.Array, w_prepped: jax.Array, meta: _TableMeta,
                    *, tile_tokens: int | None = None):
    """out[..., :] = weight[tokens, :] * sqrt(emb_size) via a Pallas kernel."""
    V, E, k, v_pad, e_cols, vchunk, scale = meta
    lead_shape = tokens.shape
    N = math.prod(lead_shape) if lead_shape else 1
    out_dtype = w_prepped.dtype
    isz = jnp.dtype(out_dtype).itemsize
    e_out = k * e_cols
    vmem_limit = _vmem_limit_bytes()
    table_bytes = v_pad * e_cols * isz

    # ---- token tile: target ~1 MiB of output per grid step so the ~0.35us
    # per-step overhead is amortized (HBM-writeback roofline).
    unit = 8 * k                                    # packed rows stay % 8 == 0
    if tile_tokens is None:
        tile_tokens = max(2048, (1 << 20) // (e_cols * isz))
    # Crude VMEM budget so huge tiles don't evict the table / double buffers.
    per_tok_vmem = 2 * e_cols * isz + _cdiv(vchunk * 4, k)
    budget = vmem_limit // 2 - 2 * table_bytes
    if budget > 0:
        tile_tokens = min(tile_tokens, max(unit, budget // per_tok_vmem))
    else:
        tile_tokens = min(tile_tokens, 2048)

    tile0 = max(unit, min(_round_up(tile_tokens, unit), _round_up(N, unit)))
    grid_n = _cdiv(N, tile0)
    if _round_up(N, unit) >= 2 * unit:
        grid_n = max(grid_n, 2)          # keep both v7x TensorCores busy
    tile = _round_up(_cdiv(N, grid_n), unit)
    n_pad = _round_up(N, tile)
    grid_n = n_pad // tile
    r_tile, r_total = tile // k, n_pad // k

    tok = tokens.reshape(-1).astype(jnp.int32)
    if n_pad != N:
        tok = jnp.pad(tok, (0, n_pad - N))   # padded ids hit row 0; sliced off
    tok = tok.reshape(r_total, k)

    # Advisory only; on v7x each TensorCore re-reads the (small) table once.
    cost = pl.CostEstimate(
        flops=2 * n_pad * v_pad * e_cols,
        transcendentals=0,
        bytes_accessed=n_pad * 4 + table_bytes + n_pad * e_cols * isz,
    )

    def run(table_pipeline_mode, combine):
        spec_kwargs = {}
        if table_pipeline_mode is not None:
            spec_kwargs["pipeline_mode"] = table_pipeline_mode
        # Grid-invariant table: constant index_map -> fetched once per core;
        # Buffered(1) (when supported) avoids double-buffering it.
        table_spec = pl.BlockSpec((v_pad, e_cols), lambda i: (0, 0),
                                  **spec_kwargs)
        kernel = functools.partial(
            _token_embedding_kernel, scale=scale, k=k, e_cols=e_cols,
            v_pad=v_pad, vchunk=vchunk, combine=combine)
        return pl.pallas_call(
            kernel,
            out_shape=jax.ShapeDtypeStruct((r_total, e_out), out_dtype),
            grid_spec=pltpu.PrefetchScalarGridSpec(
                num_scalar_prefetch=0,
                grid=(grid_n,),
                in_specs=[
                    pl.BlockSpec((r_tile, k), lambda i: (i, 0)),
                    table_spec,
                ],
                out_specs=pl.BlockSpec((r_tile, e_out), lambda i: (i, 0)),
            ),
            compiler_params=pltpu.CompilerParams(
                dimension_semantics=("parallel",),   # shard tiles across TCs
                vmem_limit_bytes=vmem_limit,
            ),
            cost_estimate=cost,
        )(tok, w_prepped)

    # Preferred config first; degrade gracefully if this jax/Mosaic build
    # rejects single-buffering or minor-dim concatenation.
    attempts = []
    if hasattr(pl, "Buffered"):
        attempts.append(("buffered1", "concat"))
    attempts += [(None, "concat"), (None, "slice")]
    out = None
    for i, (mode, combine) in enumerate(attempts):
        try:
            pmode = pl.Buffered(1) if mode == "buffered1" else None
            out = run(pmode, combine)
            break
        except Exception:
            if i == len(attempts) - 1:
                raise

    # (n_pad/k, k*e_cols) is row-major-identical to (n_pad, e_cols).
    return out.reshape(n_pad, e_cols)[:N, :E].reshape(*lead_shape, E)


class TokenEmbedding:
    """Pallas-TPU TokenEmbedding: forward(tokens) = W[tokens] * sqrt(emb_size).

    The padded lookup table is built ONCE here (not per forward call). Pass a
    bf16 `weight` for full MXU rate on v6e/v7x; f32 also works (extra passes).
    """

    def __init__(self, vocab_size: int, emb_size: int, *, weight=None,
                 key=None, dtype=jnp.float32):
        if weight is None:
            if key is None:
                key = jax.random.PRNGKey(0)
            # nn.Embedding default init: N(0, 1).
            weight = jax.random.normal(key, (vocab_size, emb_size), dtype=dtype)
        assert weight.shape == (vocab_size, emb_size)
        self.emb_size = emb_size
        self.weight = weight
        self._w_prepped, self._meta = prepare_embedding_table(weight)

    def __call__(self, tokens, *, tile_tokens=None):
        return token_embedding(tokens, self._w_prepped, self._meta,
                               tile_tokens=tile_tokens)


if __name__ == "__main__":
    # Small shapes consistent with the module: vocab=64, emb=32, batch=2, seq=8.
    vocab_size, emb_size = 64, 32
    B, S = 2, 8

    key = jax.random.PRNGKey(0)
    k_w, k_t = jax.random.split(key)
    weight = jax.random.normal(k_w, (vocab_size, emb_size), dtype=jnp.float32)
    tokens = jax.random.randint(k_t, (B, S), 0, vocab_size, dtype=jnp.int32)

    emb = TokenEmbedding(vocab_size, emb_size, weight=weight)
    out = jax.block_until_ready(emb(tokens))

    # Pure-JAX reference: embedding lookup * sqrt(emb_size).
    ref = jnp.take(weight, tokens, axis=0) * math.sqrt(emb_size)

    assert out.shape == (B, S, emb_size), out.shape
    assert jnp.allclose(out, ref, atol=1e-5, rtol=1e-5), "mismatch vs reference"
    print("KERNEL_OK")
</pallas_src>

<mosaic_0001>
module attributes {stable_mosaic.version = 11 : i64} {
  func.func @_token_embedding_kernel(%arg0: i32, %arg1: memref<8x4xi32, #tpu.memory_space<vmem>>, %arg2: memref<128x32xf32, #tpu.memory_space<vmem>>, %arg3: memref<8x128xf32, #tpu.memory_space<vmem>>) attributes {dimension_semantics = [#tpu.dimension_semantics<parallel>], iteration_bounds = array<i64: 1>, scalar_prefetch = 0 : i64, scratch_operands = 0 : i64, tpu.core_type = #tpu.core_type<tc>, window_params = [{transform_indices = @transform_0, window_bounds = array<i64: 8, 4>}, {pipeline_mode = #tpu.pipeline_mode<synchronous>, transform_indices = @transform_1, window_bounds = array<i64: 128, 32>}, {transform_indices = @transform_2, window_bounds = array<i64: 8, 128>}]} {
    %c0 = arith.constant 0 : index
    %c0_0 = arith.constant 0 : index
    %0 = vector.load %arg1[%c0, %c0_0] : memref<8x4xi32, #tpu.memory_space<vmem>>, vector<8x4xi32>
    %1 = tpu.iota {dimensions = array<i32: 1>} : vector<8x128xi32>
    %2 = vector.extract_strided_slice %0 {offsets = [0, 0], sizes = [8, 1], strides = [1, 1]} : vector<8x4xi32> to vector<8x1xi32>
    %3 = vector.broadcast %2 : vector<8x1xi32> to vector<8x128xi32>
    %4 = arith.cmpi eq, %1, %3 : vector<8x128xi32>
    %5 = arith.extui %4 : vector<8x128xi1> to vector<8x128xi32>
    %6 = arith.sitofp %5 : vector<8x128xi32> to vector<8x128xf32>
    %c0_1 = arith.constant 0 : index
    %c0_2 = arith.constant 0 : index
    %7 = vector.load %arg2[%c0_1, %c0_2] : memref<128x32xf32, #tpu.memory_space<vmem>>, vector<128x32xf32>
    %cst = arith.constant dense<0.000000e+00> : vector<8x32xf32>
    %8 = tpu.matmul %6, %7, %cst {dimension_numbers = #tpu.dot_dimension_numbers<[1], [0], [0], [1], [0, 0, 1, 1], [], []>} : vector<8x128xf32>, vector<128x32xf32>, vector<8x32xf32> -> vector<8x32xf32>
    %9 = vector.extract_strided_slice %0 {offsets = [0, 1], sizes = [8, 1], strides = [1, 1]} : vector<8x4xi32> to vector<8x1xi32>
    %10 = vector.broadcast %9 : vector<8x1xi32> to vector<8x128xi32>
    %11 = arith.cmpi eq, %1, %10 : vector<8x128xi32>
    %12 = arith.extui %11 : vector<8x128xi1> to vector<8x128xi32>
    %13 = arith.sitofp %12 : vector<8x128xi32> to vector<8x128xf32>
    %c0_3 = arith.constant 0 : index
    %c0_4 = arith.constant 0 : index
    %14 = vector.load %arg2[%c0_3, %c0_4] : memref<128x32xf32, #tpu.memory_space<vmem>>, vector<128x32xf32>
    %cst_5 = arith.constant dense<0.000000e+00> : vector<8x32xf32>
    %15 = tpu.matmul %13, %14, %cst_5 {dimension_numbers = #tpu.dot_dimension_numbers<[1], [0], [0], [1], [0, 0, 1, 1], [], []>} : vector<8x128xf32>, vector<128x32xf32>, vector<8x32xf32> -> vector<8x32xf32>
    %16 = vector.extract_strided_slice %0 {offsets = [0, 2], sizes = [8, 1], strides = [1, 1]} : vector<8x4xi32> to vector<8x1xi32>
    %17 = vector.broadcast %16 : vector<8x1xi32> to vector<8x128xi32>
    %18 = arith.cmpi eq, %1, %17 : vector<8x128xi32>
    %19 = arith.extui %18 : vector<8x128xi1> to vector<8x128xi32>
    %20 = arith.sitofp %19 : vector<8x128xi32> to vector<8x128xf32>
    %c0_6 = arith.constant 0 : index
    %c0_7 = arith.constant 0 : index
    %21 = vector.load %arg2[%c0_6, %c0_7] : memref<128x32xf32, #tpu.memory_space<vmem>>, vector<128x32xf32>
    %cst_8 = arith.constant dense<0.000000e+00> : vector<8x32xf32>
    %22 = tpu.matmul %20, %21, %cst_8 {dimension_numbers = #tpu.dot_dimension_numbers<[1], [0], [0], [1], [0, 0, 1, 1], [], []>} : vector<8x128xf32>, vector<128x32xf32>, vector<8x32xf32> -> vector<8x32xf32>
    %23 = vector.extract_strided_slice %0 {offsets = [0, 3], sizes = [8, 1], strides = [1, 1]} : vector<8x4xi32> to vector<8x1xi32>
    %24 = vector.broadcast %23 : vector<8x1xi32> to vector<8x128xi32>
    %25 = arith.cmpi eq, %1, %24 : vector<8x128xi32>
    %26 = arith.extui %25 : vector<8x128xi1> to vector<8x128xi32>
    %27 = arith.sitofp %26 : vector<8x128xi32> to vector<8x128xf32>
    %c0_9 = arith.constant 0 : index
    %c0_10 = arith.constant 0 : index
    %28 = vector.load %arg2[%c0_9, %c0_10] : memref<128x32xf32, #tpu.memory_space<vmem>>, vector<128x32xf32>
    %cst_11 = arith.constant dense<0.000000e+00> : vector<8x32xf32>
    %29 = tpu.matmul %27, %28, %cst_11 {dimension_numbers = #tpu.dot_dimension_numbers<[1], [0], [0], [1], [0, 0, 1, 1], [], []>} : vector<8x128xf32>, vector<128x32xf32>, vector<8x32xf32> -> vector<8x32xf32>
    %30 = tpu.concatenate %8, %15, %22, %29 in 1 : vector<8x32xf32>, vector<8x32xf32>, vector<8x32xf32>, vector<8x32xf32> -> vector<8x128xf32>
    %cst_12 = arith.constant 5.65685415 : f32
    %31 = vector.broadcast %cst_12 : f32 to vector<8x128xf32>
    %32 = arith.mulf %30, %31 : vector<8x128xf32>
    %c0_13 = arith.constant 0 : index
    %c0_14 = arith.constant 0 : index
    %33 = vector.load %arg3[%c0_13, %c0_14] : memref<8x128xf32, #tpu.memory_space<vmem>>, vector<8x128xf32>
    tpu.vector_store %arg3[%c0_13, %c0_14], %32 {strides = array<i32>} : memref<8x128xf32, #tpu.memory_space<vmem>>, vector<8x128xf32>,
    return
  }
  func.func @transform_0(%arg0: i32) -> (i32, i32) {
    %c0_i32 = arith.constant 0 : i32
    %c0_i32_0 = arith.constant 0 : i32
    return %arg0, %c0_i32 : i32, i32
  }
  func.func @transform_1(%arg0: i32) -> (i32, i32) {
    %c0_i32 = arith.constant 0 : i32
    %c0_i32_0 = arith.constant 0 : i32
    %c0_i32_1 = arith.constant 0 : i32
    return %c0_i32, %c0_i32_0 : i32, i32
  }
  func.func @transform_2(%arg0: i32) -> (i32, i32) {
    %c0_i32 = arith.constant 0 : i32
    %c0_i32_0 = arith.constant 0 : i32
    return %arg0, %c0_i32 : i32, i32
  }
}

module attributes {stable_mosaic.version = 11 : i64} {
  func.func @_token_embedding_kernel(%arg0: i32, %arg1: memref<8x4xi32, #tpu.memory_space<vmem>>, %arg2: memref<128x32xf32, #tpu.memory_space<vmem>>, %arg3: memref<8x128xf32, #tpu.memory_space<vmem>>) attributes {dimension_semantics = [#tpu.dimension_semantics<parallel>], iteration_bounds = array<i64: 1>, scalar_prefetch = 0 : i64, scratch_operands = 0 : i64, tpu.core_type = #tpu.core_type<tc>, window_params = [{transform_indices = @transform_0, window_bounds = array<i64: 8, 4>}, {pipeline_mode = #tpu.pipeline_mode<synchronous>, transform_indices = @transform_1, window_bounds = array<i64: 128, 32>}, {transform_indices = @transform_2, window_bounds = array<i64: 8, 128>}]} {
    %c0 = arith.constant 0 : index
    %c0_0 = arith.constant 0 : index
    %0 = vector.load %arg1[%c0, %c0_0] : memref<8x4xi32, #tpu.memory_space<vmem>>, vector<8x4xi32>
    %1 = tpu.iota {dimensions = array<i32: 1>} : vector<8x128xi32>
    %2 = vector.extract_strided_slice %0 {offsets = [0, 0], sizes = [8, 1], strides = [1, 1]} : vector<8x4xi32> to vector<8x1xi32>
    %3 = vector.broadcast %2 : vector<8x1xi32> to vector<8x128xi32>
    %4 = arith.cmpi eq, %1, %3 : vector<8x128xi32>
    %5 = arith.extui %4 : vector<8x128xi1> to vector<8x128xi32>
    %6 = arith.sitofp %5 : vector<8x128xi32> to vector<8x128xf32>
    %c0_1 = arith.constant 0 : index
    %c0_2 = arith.constant 0 : index
    %7 = vector.load %arg2[%c0_1, %c0_2] : memref<128x32xf32, #tpu.memory_space<vmem>>, vector<128x32xf32>
    %cst = arith.constant dense<0.000000e+00> : vector<8x32xf32>
    %8 = tpu.matmul %6, %7, %cst {dimension_numbers = #tpu.dot_dimension_numbers<[1], [0], [0], [1], [0, 0, 1, 1], [], []>} : vector<8x128xf32>, vector<128x32xf32>, vector<8x32xf32> -> vector<8x32xf32>
    %9 = vector.extract_strided_slice %0 {offsets = [0, 1], sizes = [8, 1], strides = [1, 1]} : vector<8x4xi32> to vector<8x1xi32>
    %10 = vector.broadcast %9 : vector<8x1xi32> to vector<8x128xi32>
    %11 = arith.cmpi eq, %1, %10 : vector<8x128xi32>
    %12 = arith.extui %11 : vector<8x128xi1> to vector<8x128xi32>
    %13 = arith.sitofp %12 : vector<8x128xi32> to vector<8x128xf32>
    %c0_3 = arith.constant 0 : index
    %c0_4 = arith.constant 0 : index
    %14 = vector.load %arg2[%c0_3, %c0_4] : memref<128x32xf32, #tpu.memory_space<vmem>>, vector<128x32xf32>
    %cst_5 = arith.constant dense<0.000000e+00> : vector<8x32xf32>
    %15 = tpu.matmul %13, %14, %cst_5 {dimension_numbers = #tpu.dot_dimension_numbers<[1], [0], [0], [1], [0, 0, 1, 1], [], []>} : vector<8x128xf32>, vector<128x32xf32>, vector<8x32xf32> -> vector<8x32xf32>
    %16 = vector.extract_strided_slice %0 {offsets = [0, 2], sizes = [8, 1], strides = [1, 1]} : vector<8x4xi32> to vector<8x1xi32>
    %17 = vector.broadcast %16 : vector<8x1xi32> to vector<8x128xi32>
    %18 = arith.cmpi eq, %1, %17 : vector<8x128xi32>
    %19 = arith.extui %18 : vector<8x128xi1> to vector<8x128xi32>
    %20 = arith.sitofp %19 : vector<8x128xi32> to vector<8x128xf32>
    %c0_6 = arith.constant 0 : index
    %c0_7 = arith.constant 0 : index
    %21 = vector.load %arg2[%c0_6, %c0_7] : memref<128x32xf32, #tpu.memory_space<vmem>>, vector<128x32xf32>
    %cst_8 = arith.constant dense<0.000000e+00> : vector<8x32xf32>
    %22 = tpu.matmul %20, %21, %cst_8 {dimension_numbers = #tpu.dot_dimension_numbers<[1], [0], [0], [1], [0, 0, 1, 1], [], []>} : vector<8x128xf32>, vector<128x32xf32>, vector<8x32xf32> -> vector<8x32xf32>
    %23 = vector.extract_strided_slice %0 {offsets = [0, 3], sizes = [8, 1], strides = [1, 1]} : vector<8x4xi32> to vector<8x1xi32>
    %24 = vector.broadcast %23 : vector<8x1xi32> to vector<8x128xi32>
    %25 = arith.cmpi eq, %1, %24 : vector<8x128xi32>
    %26 = arith.extui %25 : vector<8x128xi1> to vector<8x128xi32>
    %27 = arith.sitofp %26 : vector<8x128xi32> to vector<8x128xf32>
    %c0_9 = arith.constant 0 : index
    %c0_10 = arith.constant 0 : index
    %28 = vector.load %arg2[%c0_9, %c0_10] : memref<128x32xf32, #tpu.memory_space<vmem>>, vector<128x32xf32>
    %cst_11 = arith.constant dense<0.000000e+00> : vector<8x32xf32>
    %29 = tpu.matmul %27, %28, %cst_11 {dimension_numbers = #tpu.dot_dimension_numbers<[1], [0], [0], [1], [0, 0, 1, 1], [], []>} : vector<8x128xf32>, vector<128x32xf32>, vector<8x32xf32> -> vector<8x32xf32>
    %30 = tpu.concatenate %8, %15, %22, %29 in 1 : vector<8x32xf32>, vector<8x32xf32>, vector<8x32xf32>, vector<8x32xf32> -> vector<8x128xf32>
    %cst_12 = arith.constant 5.65685415 : f32
    %31 = vector.broadcast %cst_12 : f32 to vector<8x128xf32>
    %32 = arith.mulf %30, %31 : vector<8x128xf32>
    %c0_13 = arith.constant 0 : index
    %c0_14 = arith.constant 0 : index
    %33 = vector.load %arg3[%c0_13, %c0_14] : memref<8x128xf32, #tpu.memory_space<vmem>>, vector<8x128xf32>
    tpu.vector_store %arg3[%c0_13, %c0_14], %32 {strides = array<i32>} : memref<8x128xf32, #tpu.memory_space<vmem>>, vector<8x128xf32>,
    return
  }
  func.func @transform_0(%arg0: i32) -> (i32, i32) {
    %c0_i32 = arith.constant 0 : i32
    %c0_i32_0 = arith.constant 0 : i32
    return %arg0, %c0_i32 : i32, i32
  }
  func.func @transform_1(%arg0: i32) -> (i32, i32) {
    %c0_i32 = arith.constant 0 : i32
    %c0_i32_0 = arith.constant 0 : i32
    %c0_i32_1 = arith.constant 0 : i32
    return %c0_i32, %c0_i32_0 : i32, i32
  }
  func.func @transform_2(%arg0: i32) -> (i32, i32) {
    %c0_i32 = arith.constant 0 : i32
    %c0_i32_0 = arith.constant 0 : i32
    return %arg0, %c0_i32 : i32, i32
  }
}

module attributes {stable_mosaic.version = 11 : i64} {
  func.func @_token_embedding_kernel(%arg0: i32, %arg1: memref<8x4xi32, #tpu.memory_space<vmem>>, %arg2: memref<128x32xf32, #tpu.memory_space<vmem>>, %arg3: memref<8x128xf32, #tpu.memory_space<vmem>>) attributes {dimension_semantics = [#tpu.dimension_semantics<parallel>], iteration_bounds = array<i64: 1>, scalar_prefetch = 0 : i64, scratch_operands = 0 : i64, tpu.core_type = #tpu.core_type<tc>, window_params = [{transform_indices = @transform_0, window_bounds = array<i64: 8, 4>}, {pipeline_mode = #tpu.pipeline_mode<synchronous>, transform_indices = @transform_1, window_bounds = array<i64: 128, 32>}, {transform_indices = @transform_2, window_bounds = array<i64: 8, 128>}]} {
    %c0 = arith.constant 0 : index
    %c0_0 = arith.constant 0 : index
    %0 = vector.load %arg1[%c0, %c0_0] : memref<8x4xi32, #tpu.memory_space<vmem>>, vector<8x4xi32>
    %1 = tpu.iota {dimensions = array<i32: 1>} : vector<8x128xi32>
    %2 = vector.extract_strided_slice %0 {offsets = [0, 0], sizes = [8, 1], strides = [1, 1]} : vector<8x4xi32> to vector<8x1xi32>
    %3 = vector.broadcast %2 : vector<8x1xi32> to vector<8x128xi32>
    %4 = arith.cmpi eq, %1, %3 : vector<8x128xi32>
    %5 = arith.extui %4 : vector<8x128xi1> to vector<8x128xi32>
    %6 = arith.sitofp %5 : vector<8x128xi32> to vector<8x128xf32>
    %c0_1 = arith.constant 0 : index
    %c0_2 = arith.constant 0 : index
    %7 = vector.load %arg2[%c0_1, %c0_2] : memref<128x32xf32, #tpu.memory_space<vmem>>, vector<128x32xf32>
    %cst = arith.constant dense<0.000000e+00> : vector<8x32xf32>
    %8 = tpu.matmul %6, %7, %cst {dimension_numbers = #tpu.dot_dimension_numbers<[1], [0], [0], [1], [0, 0, 1, 1], [], []>} : vector<8x128xf32>, vector<128x32xf32>, vector<8x32xf32> -> vector<8x32xf32>
    %9 = vector.extract_strided_slice %0 {offsets = [0, 1], sizes = [8, 1], strides = [1, 1]} : vector<8x4xi32> to vector<8x1xi32>
    %10 = vector.broadcast %9 : vector<8x1xi32> to vector<8x128xi32>
    %11 = arith.cmpi eq, %1, %10 : vector<8x128xi32>
    %12 = arith.extui %11 : vector<8x128xi1> to vector<8x128xi32>
    %13 = arith.sitofp %12 : vector<8x128xi32> to vector<8x128xf32>
    %c0_3 = arith.constant 0 : index
    %c0_4 = arith.constant 0 : index
    %14 = vector.load %arg2[%c0_3, %c0_4] : memref<128x32xf32, #tpu.memory_space<vmem>>, vector<128x32xf32>
    %cst_5 = arith.constant dense<0.000000e+00> : vector<8x32xf32>
    %15 = tpu.matmul %13, %14, %cst_5 {dimension_numbers = #tpu.dot_dimension_numbers<[1], [0], [0], [1], [0, 0, 1, 1], [], []>} : vector<8x128xf32>, vector<128x32xf32>, vector<8x32xf32> -> vector<8x32xf32>
    %16 = vector.extract_strided_slice %0 {offsets = [0, 2], sizes = [8, 1], strides = [1, 1]} : vector<8x4xi32> to vector<8x1xi32>
    %17 = vector.broadcast %16 : vector<8x1xi32> to vector<8x128xi32>
    %18 = arith.cmpi eq, %1, %17 : vector<8x128xi32>
    %19 = arith.extui %18 : vector<8x128xi1> to vector<8x128xi32>
    %20 = arith.sitofp %19 : vector<8x128xi32> to vector<8x128xf32>
    %c0_6 = arith.constant 0 : index
    %c0_7 = arith.constant 0 : index
    %21 = vector.load %arg2[%c0_6, %c0_7] : memref<128x32xf32, #tpu.memory_space<vmem>>, vector<128x32xf32>
    %cst_8 = arith.constant dense<0.000000e+00> : vector<8x32xf32>
    %22 = tpu.matmul %20, %21, %cst_8 {dimension_numbers = #tpu.dot_dimension_numbers<[1], [0], [0], [1], [0, 0, 1, 1], [], []>} : vector<8x128xf32>, vector<128x32xf32>, vector<8x32xf32> -> vector<8x32xf32>
    %23 = vector.extract_strided_slice %0 {offsets = [0, 3], sizes = [8, 1], strides = [1, 1]} : vector<8x4xi32> to vector<8x1xi32>
    %24 = vector.broadcast %23 : vector<8x1xi32> to vector<8x128xi32>
    %25 = arith.cmpi eq, %1, %24 : vector<8x128xi32>
    %26 = arith.extui %25 : vector<8x128xi1> to vector<8x128xi32>
    %27 = arith.sitofp %26 : vector<8x128xi32> to vector<8x128xf32>
    %c0_9 = arith.constant 0 : index
    %c0_10 = arith.constant 0 : index
    %28 = vector.load %arg2[%c0_9, %c0_10] : memref<128x32xf32, #tpu.memory_space<vmem>>, vector<128x32xf32>
    %cst_11 = arith.constant dense<0.000000e+00> : vector<8x32xf32>
    %29 = tpu.matmul %27, %28, %cst_11 {dimension_numbers = #tpu.dot_dimension_numbers<[1], [0], [0], [1], [0, 0, 1, 1], [], []>} : vector<8x128xf32>, vector<128x32xf32>, vector<8x32xf32> -> vector<8x32xf32>
    %cst_12 = arith.constant 5.65685415 : f32
    %30 = vector.broadcast %cst_12 : f32 to vector<8x32xf32>
    %31 = arith.mulf %8, %30 : vector<8x32xf32>
    %c0_13 = arith.constant 0 : index
    %c0_14 = arith.constant 0 : index
    %32 = vector.load %arg3[%c0_13, %c0_14] : memref<8x128xf32, #tpu.memory_space<vmem>>, vector<8x32xf32>
    tpu.vector_store %arg3[%c0_13, %c0_14], %31 {strides = array<i32>} : memref<8x128xf32, #tpu.memory_space<vmem>>, vector<8x32xf32>,
    %cst_15 = arith.constant 5.65685415 : f32
    %33 = vector.broadcast %cst_15 : f32 to vector<8x32xf32>
    %34 = arith.mulf %15, %33 : vector<8x32xf32>
    %c0_16 = arith.constant 0 : index
    %c32 = arith.constant 32 : index
    %35 = vector.load %arg3[%c0_16, %c32] : memref<8x128xf32, #tpu.memory_space<vmem>>, vector<8x32xf32>
    tpu.vector_store %arg3[%c0_16, %c32], %34 {strides = array<i32>} : memref<8x128xf32, #tpu.memory_space<vmem>>, vector<8x32xf32>,
    %cst_17 = arith.constant 5.65685415 : f32
    %36 = vector.broadcast %cst_17 : f32 to vector<8x32xf32>
    %37 = arith.mulf %22, %36 : vector<8x32xf32>
    %c0_18 = arith.constant 0 : index
    %c64 = arith.constant 64 : index
    %38 = vector.load %arg3[%c0_18, %c64] : memref<8x128xf32, #tpu.memory_space<vmem>>, vector<8x32xf32>
    tpu.vector_store %arg3[%c0_18, %c64], %37 {strides = array<i32>} : memref<8x128xf32, #tpu.memory_space<vmem>>, vector<8x32xf32>,
    %cst_19 = arith.constant 5.65685415 : f32
    %39 = vector.broadcast %cst_19 : f32 to vector<8x32xf32>
    %40 = arith.mulf %29, %39 : vector<8x32xf32>
    %c0_20 = arith.constant 0 : index
    %c96 = arith.constant 96 : index
    %41 = vector.load %arg3[%c0_20, %c96] : memref<8x128xf32, #tpu.memory_space<vmem>>, vector<8x32xf32>
    tpu.vector_store %arg3[%c0_20, %c96], %40 {strides = array<i32>} : memref<8x128xf32, #tpu.memory_space<vmem>>, vector<8x32xf32>,
    return
  }
  func.func @transform_0(%arg0: i32) -> (i32, i32) {
    %c0_i32 = arith.constant 0 : i32
    %c0_i32_0 = arith.constant 0 : i32
    return %arg0, %c0_i32 : i32, i32
  }
  func.func @transform_1(%arg0: i32) -> (i32, i32) {
    %c0_i32 = arith.constant 0 : i32
    %c0_i32_0 = arith.constant 0 : i32
    %c0_i32_1 = arith.constant 0 : i32
    return %c0_i32, %c0_i32_0 : i32, i32
  }
  func.func @transform_2(%arg0: i32) -> (i32, i32) {
    %c0_i32 = arith.constant 0 : i32
    %c0_i32_0 = arith.constant 0 : i32
    return %arg0, %c0_i32 : i32, i32
  }
}

</mosaic_0001>

<llo_original>
// kernel: tpu_custom_call.1
$region0: #{tpu_custom_call.1}
  #allocation0 [shape = 'u32[]', space=smem, size = 0x4, offset = 0x4, fixed_abs, tag = 'smem constant byte address 0x4 - core index']
  #allocation1 [shape = 'u32[144,128]{1,0:T(1,128)}', space=vmem, size = 0x12000, scoped, tag = 'internal scratch']
  %s0 = inlined_call_operand.vmem [shape: s32[8,4], index: 0, kind: input, shape index: {}]
  %s1 = inlined_call_operand.vmem [shape: f32[128,32], index: 1, kind: input, shape index: {}]
  %s2 = inlined_call_operand.hbm [shape: f32[8,128], index: 2, kind: output, shape index: {}]
  %s3 = sld [smem:[#allocation0]]
  $region18: #{tpu_custom_call.1} parent=0
    _
  %s5 = ssub.s32 1, %s3
  %s6 = scalar_select 0, %s5, %s3
  $region1: #{tpu_custom_call.1} parent=0
    #allocation2 [shape = 'u8[4096]{0}', space=vmem, size = 0x1000, scoped, tag = 'output window, operand 0, single buffered']
    #allocation3 [shape = 's32[1]{0}', space=sflag, size = 0x4, scoped, tag = 'scoped memory for tpu_custom_call.1']
    %7 = vsyncpa [#allocation3], 0
    // Predicated region
    $region2: #{tpu_custom_call.1} parent=1 // pred_check
      _
    $region3: #{tpu_custom_call.1} parent=1 // pred_check_branch
      %9 = sbr.rel (0) target = $region5
    $region4: #{tpu_custom_call.1} parent=1 // pred_region
      _
    $region5: #{tpu_custom_call.1} parent=1 // pred_fallthru
      _
    // Predicated region
    $region6: #{tpu_custom_call.1} parent=1 // pred_check
      _
    $region7: #{tpu_custom_call.1} parent=1 // pred_check_branch
      %11 = sbr.rel (0) target = $region9
    $region8: #{tpu_custom_call.1} parent=1 // pred_region
      _
    $region9: #{tpu_custom_call.1} parent=1 // pred_fallthru
      _
    %v12 = vld [vmem:[%s0] sm:$0xff]
    %v13 = vlaneseq
    %v14 = vand.u32 %v13, 127
    %15 = vset.pattern.permute.xlu0 0
    %16 = vperm.xlu0 %15, %v12
    %v17 = vpop.permute.xlu0 %16
    %vm18 = vcmp.eq.s32.totalorder %v14, %v17
    %v19 = vsel %vm18, 1, 0
    %v20 = vcvt.s32.f32 %v19
    %v21 = vld [vmem:[%s1] sm:$0xff]
    %v22 = vld [vmem:[%s1 + $0x8] sm:$0xff]
    %v23 = vld [vmem:[%s1 + $0x10] sm:$0xff]
    %v24 = vld [vmem:[%s1 + $0x18] sm:$0xff]
    %v25 = vld [vmem:[%s1 + $0x20] sm:$0xff]
    %v26 = vld [vmem:[%s1 + $0x28] sm:$0xff]
    %v27 = vld [vmem:[%s1 + $0x30] sm:$0xff]
    %v28 = vld [vmem:[%s1 + $0x38] sm:$0xff]
    %v29 = vld [vmem:[%s1 + $0x40] sm:$0xff]
    %v30 = vld [vmem:[%s1 + $0x48] sm:$0xff]
    %v31 = vld [vmem:[%s1 + $0x50] sm:$0xff]
    %v32 = vld [vmem:[%s1 + $0x58] sm:$0xff]
    %v33 = vld [vmem:[%s1 + $0x60] sm:$0xff]
    %v34 = vld [vmem:[%s1 + $0x68] sm:$0xff]
    %v35 = vld [vmem:[%s1 + $0x70] sm:$0xff]
    %v36 = vld [vmem:[%s1 + $0x78] sm:$0xff]
    %37 = vmatprep.subr.mxu0 0.0
    %38 = vmatpush1.msra.mxu0 %v21
    %39 = vmatprep.subr.mxu0 0.0
    %40 = vmatpush1.msra.mxu0 %v22
    %41 = vmatprep.subr.mxu0 0.0
    %42 = vmatpush1.msra.mxu0 %v23
    %43 = vmatprep.subr.mxu0 0.0
    %44 = vmatpush1.msra.mxu0 %v24
    %45 = vmatprep.subr.mxu0 0.0
    %46 = vmatpush1.msra.mxu0 %v25
    %47 = vmatprep.subr.mxu0 0.0
    %48 = vmatpush1.msra.mxu0 %v26
    %49 = vmatprep.subr.mxu0 0.0
    %50 = vmatpush1.msra.mxu0 %v27
    %51 = vmatprep.subr.mxu0 0.0
    %52 = vmatpush1.msra.mxu0 %v28
    %53 = vmatprep.subr.mxu0 0.0
    %54 = vmatpush1.msra.mxu0 %v29
    %55 = vmatprep.subr.mxu0 0.0
    %56 = vmatpush1.msra.mxu0 %v30
    %57 = vmatprep.subr.mxu0 0.0
    %58 = vmatpush1.msra.mxu0 %v31
    %59 = vmatprep.subr.mxu0 0.0
    %60 = vmatpush1.msra.mxu0 %v32
    %61 = vmatprep.subr.mxu0 0.0
    %62 = vmatpush1.msra.mxu0 %v33
    %63 = vmatprep.subr.mxu0 0.0
    %64 = vmatpush1.msra.mxu0 %v34
    %65 = vmatprep.subr.mxu0 0.0
    %66 = vmatpush1.msra.mxu0 %v35
    %67 = vmatprep.subr.mxu0 0.0
    %68 = vmatpush1.msra.mxu0 %v36
    %69 = vmatprep.subr.mxu0 0.0
    %70 = vmatpush1.msra.mxu0 0.0
    %71 = vmatprep.subr.mxu0 0.0
    %72 = vmatpush1.msra.mxu0 0.0
    %73 = vmatprep.subr.mxu0 0.0
    %74 = vmatpush1.msra.mxu0 0.0
    %75 = vmatprep.subr.mxu0 0.0
    %76 = vmatpush1.msra.mxu0 0.0
    %77 = vmatprep.subr.mxu0 0.0
    %78 = vmatpush1.msra.mxu0 0.0
    %79 = vmatprep.subr.mxu0 0.0
    %80 = vmatpush1.msra.mxu0 0.0
    %81 = vmatprep.subr.mxu0 0.0
    %82 = vmatpush1.msra.mxu0 0.0
    %83 = vmatprep.subr.mxu0 0.0
    %84 = vmatpush1.msra.mxu0 0.0
    %85 = vmatprep.subr.mxu0 0.0
    %86 = vmatpush1.msra.mxu0 0.0
    %87 = vmatprep.subr.mxu0 0.0
    %88 = vmatpush1.msra.mxu0 0.0
    %89 = vmatprep.subr.mxu0 0.0
    %90 = vmatpush1.msra.mxu0 0.0
    %91 = vmatprep.subr.mxu0 0.0
    %92 = vmatpush1.msra.mxu0 0.0
    %93 = vmatprep.subr.mxu0 0.0
    %94 = vmatpush1.msra.mxu0 0.0
    %95 = vmatprep.subr.mxu0 0.0
    %96 = vmatpush1.msra.mxu0 0.0
    %97 = vmatprep.subr.mxu0 0.0
    %98 = vmatpush1.msra.mxu0 0.0
    %99 = vmatprep.subr.mxu0 0.0
    %100 = vmatpush1.msra.mxu0 0.0
    %101 = vmatprep.mubr.f32.mxu0 0.0
    %102 = vmatmul.mubr.f32.gmra.mrb[0].mxu0 %v20
    %v103 = vpop.f32.mrb[0].mxu0
    %v104 = vadd.f32 0.0, %v103
    %v105 = vpop.f32.mrb[0].mxu0
    %106 = vdwg.mxu0
    %107 = vset.pattern.permute.xlu0 1
    %108 = vperm.xlu0 %107, %v12
    %v109 = vpop.permute.xlu0 %108
    %vm110 = vcmp.eq.s32.totalorder %v14, %v109
    %v111 = vsel %vm110, 1, 0
    %v112 = vcvt.s32.f32 %v111
    %113 = vmatprep.subr.mxu0 0.0
    %114 = vmatpush1.msra.mxu0 %v21
    %115 = vmatprep.subr.mxu0 0.0
    %116 = vmatpush1.msra.mxu0 %v22
    %117 = vmatprep.subr.mxu0 0.0
    %118 = vmatpush1.msra.mxu0 %v23
    %119 = vmatprep.subr.mxu0 0.0
    %120 = vmatpush1.msra.mxu0 %v24
    %121 = vmatprep.subr.mxu0 0.0
    %122 = vmatpush1.msra.mxu0 %v25
    %123 = vmatprep.subr.mxu0 0.0
    %124 = vmatpush1.msra.mxu0 %v26
    %125 = vmatprep.subr.mxu0 0.0
    %126 = vmatpush1.msra.mxu0 %v27
    %127 = vmatprep.subr.mxu0 0.0
    %128 = vmatpush1.msra.mxu0 %v28
    %129 = vmatprep.subr.mxu0 0.0
    %130 = vmatpush1.msra.mxu0 %v29
    %131 = vmatprep.subr.mxu0 0.0
    %132 = vmatpush1.msra.mxu0 %v30
    %133 = vmatprep.subr.mxu0 0.0
    %134 = vmatpush1.msra.mxu0 %v31
    %135 = vmatprep.subr.mxu0 0.0
    %136 = vmatpush1.msra.mxu0 %v32
    %137 = vmatprep.subr.mxu0 0.0
    %138 = vmatpush1.msra.mxu0 %v33
    %139 = vmatprep.subr.mxu0 0.0
    %140 = vmatpush1.msra.mxu0 %v34
    %141 = vmatprep.subr.mxu0 0.0
    %142 = vmatpush1.msra.mxu0 %v35
    %143 = vmatprep.subr.mxu0 0.0
    %144 = vmatpush1.msra.mxu0 %v36
    %145 = vmatprep.subr.mxu0 0.0
    %146 = vmatpush1.msra.mxu0 0.0
    %147 = vmatprep.subr.mxu0 0.0
    %148 = vmatpush1.msra.mxu0 0.0
    %149 = vmatprep.subr.mxu0 0.0
    %150 = vmatpush1.msra.mxu0 0.0
    %151 = vmatprep.subr.mxu0 0.0
    %152 = vmatpush1.msra.mxu0 0.0
    %153 = vmatprep.subr.mxu0 0.0
    %154 = vmatpush1.msra.mxu0 0.0
    %155 = vmatprep.subr.mxu0 0.0
    %156 = vmatpush1.msra.mxu0 0.0
    %157 = vmatprep.subr.mxu0 0.0
    %158 = vmatpush1.msra.mxu0 0.0
    %159 = vmatprep.subr.mxu0 0.0
    %160 = vmatpush1.msra.mxu0 0.0
    %161 = vmatprep.subr.mxu0 0.0
    %162 = vmatpush1.msra.mxu0 0.0
    %163 = vmatprep.subr.mxu0 0.0
    %164 = vmatpush1.msra.mxu0 0.0
    %165 = vmatprep.subr.mxu0 0.0
    %166 = vmatpush1.msra.mxu0 0.0
    %167 = vmatprep.subr.mxu0 0.0
    %168 = vmatpush1.msra.mxu0 0.0
    %169 = vmatprep.subr.mxu0 0.0
    %170 = vmatpush1.msra.mxu0 0.0
    %171 = vmatprep.subr.mxu0 0.0
    %172 = vmatpush1.msra.mxu0 0.0
    %173 = vmatprep.subr.mxu0 0.0
    %174 = vmatpush1.msra.mxu0 0.0
    %175 = vmatprep.subr.mxu0 0.0
    %176 = vmatpush1.msra.mxu0 0.0
    %177 = vmatprep.mubr.f32.mxu0 0.0
    %178 = vmatmul.mubr.f32.gmra.mrb[0].mxu0 %v112
    %v179 = vpop.f32.mrb[0].mxu0
    %v180 = vadd.f32 0.0, %v179
    %v181 = vpop.f32.mrb[0].mxu0
    %182 = vdwg.mxu0
    %183 = vset.pattern.permute.xlu0 2
    %184 = vperm.xlu0 %183, %v12
    %v185 = vpop.permute.xlu0 %184
    %vm186 = vcmp.eq.s32.totalorder %v14, %v185
    %v187 = vsel %vm186, 1, 0
    %v188 = vcvt.s32.f32 %v187
    %189 = vmatprep.subr.mxu0 0.0
    %190 = vmatpush1.msra.mxu0 %v21
    %191 = vmatprep.subr.mxu0 0.0
    %192 = vmatpush1.msra.mxu0 %v22
    %193 = vmatprep.subr.mxu0 0.0
    %194 = vmatpush1.msra.mxu0 %v23
    %195 = vmatprep.subr.mxu0 0.0
    %196 = vmatpush1.msra.mxu0 %v24
    %197 = vmatprep.subr.mxu0 0.0
    %198 = vmatpush1.msra.mxu0 %v25
    %199 = vmatprep.subr.mxu0 0.0
    %200 = vmatpush1.msra.mxu0 %v26
    %201 = vmatprep.subr.mxu0 0.0
    %202 = vmatpush1.msra.mxu0 %v27
    %203 = vmatprep.subr.mxu0 0.0
    %204 = vmatpush1.msra.mxu0 %v28
    %205 = vmatprep.subr.mxu0 0.0
    %206 = vmatpush1.msra.mxu0 %v29
    %207 = vmatprep.subr.mxu0 0.0
    %208 = vmatpush1.msra.mxu0 %v30
    %209 = vmatprep.subr.mxu0 0.0
    %210 = vmatpush1.msra.mxu0 %v31
    %211 = vmatprep.subr.mxu0 0.0
    %212 = vmatpush1.msra.mxu0 %v32
    %213 = vmatprep.subr.mxu0 0.0
    %214 = vmatpush1.msra.mxu0 %v33
    %215 = vmatprep.subr.mxu0 0.0
    %216 = vmatpush1.msra.mxu0 %v34
    %217 = vmatprep.subr.mxu0 0.0
    %218 = vmatpush1.msra.mxu0 %v35
    %219 = vmatprep.subr.mxu0 0.0
    %220 = vmatpush1.msra.mxu0 %v36
    %221 = vmatprep.subr.mxu0 0.0
    %222 = vmatpush1.msra.mxu0 0.0
    %223 = vmatprep.subr.mxu0 0.0
    %224 = vmatpush1.msra.mxu0 0.0
    %225 = vmatprep.subr.mxu0 0.0
    %226 = vmatpush1.msra.mxu0 0.0
    %227 = vmatprep.subr.mxu0 0.0
    %228 = vmatpush1.msra.mxu0 0.0
    %229 = vmatprep.subr.mxu0 0.0
    %230 = vmatpush1.msra.mxu0 0.0
    %231 = vmatprep.subr.mxu0 0.0
    %232 = vmatpush1.msra.mxu0 0.0
    %233 = vmatprep.subr.mxu0 0.0
    %234 = vmatpush1.msra.mxu0 0.0
    %235 = vmatprep.subr.mxu0 0.0
    %236 = vmatpush1.msra.mxu0 0.0
    %237 = vmatprep.subr.mxu0 0.0
    %238 = vmatpush1.msra.mxu0 0.0
    %239 = vmatprep.subr.mxu0 0.0
    %240 = vmatpush1.msra.mxu0 0.0
    %241 = vmatprep.subr.mxu0 0.0
    %242 = vmatpush1.msra.mxu0 0.0
    %243 = vmatprep.subr.mxu0 0.0
    %244 = vmatpush1.msra.mxu0 0.0
    %245 = vmatprep.subr.mxu0 0.0
    %246 = vmatpush1.msra.mxu0 0.0
    %247 = vmatprep.subr.mxu0 0.0
    %248 = vmatpush1.msra.mxu0 0.0
    %249 = vmatprep.subr.mxu0 0.0
    %250 = vmatpush1.msra.mxu0 0.0
    %251 = vmatprep.subr.mxu0 0.0
    %252 = vmatpush1.msra.mxu0 0.0
    %253 = vmatprep.mubr.f32.mxu0 0.0
    %254 = vmatmul.mubr.f32.gmra.mrb[0].mxu0 %v188
    %v255 = vpop.f32.mrb[0].mxu0
    %v256 = vadd.f32 0.0, %v255
    %v257 = vpop.f32.mrb[0].mxu0
    %258 = vdwg.mxu0
    %259 = vset.pattern.permute.xlu0 3
    %260 = vperm.xlu0 %259, %v12
    %v261 = vpop.permute.xlu0 %260
    %vm262 = vcmp.eq.s32.totalorder %v14, %v261
    %v263 = vsel %vm262, 1, 0
    %v264 = vcvt.s32.f32 %v263
    %265 = vmatprep.subr.mxu0 0.0
    %266 = vmatpush1.msra.mxu0 %v21
    %267 = vmatprep.subr.mxu0 0.0
    %268 = vmatpush1.msra.mxu0 %v22
    %269 = vmatprep.subr.mxu0 0.0
    %270 = vmatpush1.msra.mxu0 %v23
    %271 = vmatprep.subr.mxu0 0.0
    %272 = vmatpush1.msra.mxu0 %v24
    %273 = vmatprep.subr.mxu0 0.0
    %274 = vmatpush1.msra.mxu0 %v25
    %275 = vmatprep.subr.mxu0 0.0
    %276 = vmatpush1.msra.mxu0 %v26
    %277 = vmatprep.subr.mxu0 0.0
    %278 = vmatpush1.msra.mxu0 %v27
    %279 = vmatprep.subr.mxu0 0.0
    %280 = vmatpush1.msra.mxu0 %v28
    %281 = vmatprep.subr.mxu0 0.0
    %282 = vmatpush1.msra.mxu0 %v29
    %283 = vmatprep.subr.mxu0 0.0
    %284 = vmatpush1.msra.mxu0 %v30
    %285 = vmatprep.subr.mxu0 0.0
    %286 = vmatpush1.msra.mxu0 %v31
    %287 = vmatprep.subr.mxu0 0.0
    %288 = vmatpush1.msra.mxu0 %v32
    %289 = vmatprep.subr.mxu0 0.0
    %290 = vmatpush1.msra.mxu0 %v33
    %291 = vmatprep.subr.mxu0 0.0
    %292 = vmatpush1.msra.mxu0 %v34
    %293 = vmatprep.subr.mxu0 0.0
    %294 = vmatpush1.msra.mxu0 %v35
    %295 = vmatprep.subr.mxu0 0.0
    %296 = vmatpush1.msra.mxu0 %v36
    %297 = vmatprep.subr.mxu0 0.0
    %298 = vmatpush1.msra.mxu0 0.0
    %299 = vmatprep.subr.mxu0 0.0
    %300 = vmatpush1.msra.mxu0 0.0
    %301 = vmatprep.subr.mxu0 0.0
    %302 = vmatpush1.msra.mxu0 0.0
    %303 = vmatprep.subr.mxu0 0.0
    %304 = vmatpush1.msra.mxu0 0.0
    %305 = vmatprep.subr.mxu0 0.0
    %306 = vmatpush1.msra.mxu0 0.0
    %307 = vmatprep.subr.mxu0 0.0
    %308 = vmatpush1.msra.mxu0 0.0
    %309 = vmatprep.subr.mxu0 0.0
    %310 = vmatpush1.msra.mxu0 0.0
    %311 = vmatprep.subr.mxu0 0.0
    %312 = vmatpush1.msra.mxu0 0.0
    %313 = vmatprep.subr.mxu0 0.0
    %314 = vmatpush1.msra.mxu0 0.0
    %315 = vmatprep.subr.mxu0 0.0
    %316 = vmatpush1.msra.mxu0 0.0
    %317 = vmatprep.subr.mxu0 0.0
    %318 = vmatpush1.msra.mxu0 0.0
    %319 = vmatprep.subr.mxu0 0.0
    %320 = vmatpush1.msra.mxu0 0.0
    %321 = vmatprep.subr.mxu0 0.0
    %322 = vmatpush1.msra.mxu0 0.0
    %323 = vmatprep.subr.mxu0 0.0
    %324 = vmatpush1.msra.mxu0 0.0
    %325 = vmatprep.subr.mxu0 0.0
    %326 = vmatpush1.msra.mxu0 0.0
    %327 = vmatprep.subr.mxu0 0.0
    %328 = vmatpush1.msra.mxu0 0.0
    %329 = vmatprep.mubr.f32.mxu0 0.0
    %330 = vmatmul.mubr.f32.gmra.mrb[0].mxu0 %v264
    %v331 = vpop.f32.mrb[0].mxu0
    %v332 = vadd.f32 0.0, %v331
    %v333 = vpop.f32.mrb[0].mxu0
    %334 = vdwg.mxu0
    %336 = vrot.lane.b32.xlu0 %v180, 32
    %v337 = vpop.permute.xlu0 %336
    %340 = vrot.lane.b32.xlu0 %v256, 64
    %v341 = vpop.permute.xlu0 %340
    %344 = vrot.lane.b32.xlu0 %v332, 96
    %v345 = vpop.permute.xlu0 %344
    %vm347 = vcmask 261120
    %v348 = vsel %vm347, %v104, %v337
    %vm349 = vcmask 523264
    %v350 = vsel %vm349, %v348, %v341
    %vm351 = vcmask 785408
    %v352 = vsel %vm351, %v350, %v345
    %v353 = vmul.f32 %v352, 5.656854
    %354 = vst [vmem:[#allocation2] sm:$0xff] %v353
    // Predicated region
    $region10: #{tpu_custom_call.1} parent=1 // pred_check
      _
    $region11: #{tpu_custom_call.1} parent=1 // pred_check_branch
      %356 = sbr.rel (0) target = $region13
    $region12: #{tpu_custom_call.1} parent=1 // pred_region
      %s358 = ssub.s32 128, 128
      %359 = vsyncadd [#allocation3], %s358
      %s361 = sshll.u32 [#allocation2], 4
      %s362 = int_to_ptr.vmem [resolvable:$true] %s361
      %364 = dma.vmem_to_hbm [thread:$0]  %s362, 128, %s2, [#allocation3]
    $region13: #{tpu_custom_call.1} parent=1 // pred_fallthru
      _
    // Predicated region
    $region14: #{tpu_custom_call.1} parent=1 // pred_check
      _
    $region15: #{tpu_custom_call.1} parent=1 // pred_check_branch
      %366 = sbr.rel (0) target = $region17
    $region16: #{tpu_custom_call.1} parent=1 // pred_region
      %367 = dma.done [#allocation3], 128
    $region17: #{tpu_custom_call.1} parent=1 // pred_fallthru
      _
    %368 = vsyncpa [#allocation3], 1

// kernel: tpu_custom_call.1
$region0: #{tpu_custom_call.1}
  #allocation0 [shape = 'u32[]', space=smem, size = 0x4, offset = 0x4, fixed_abs, tag = 'smem constant byte address 0x4 - core index']
  #allocation1 [shape = 'u32[144,128]{1,0:T(1,128)}', space=vmem, size = 0x12000, scoped, tag = 'internal scratch']
  %s0 = inlined_call_operand.vmem [shape: s32[8,4], index: 0, kind: input, shape index: {}]
  %s1 = inlined_call_operand.vmem [shape: f32[128,32], index: 1, kind: input, shape index: {}]
  %s2 = inlined_call_operand.hbm [shape: f32[8,128], index: 2, kind: output, shape index: {}]
  %s3 = sld [smem:[#allocation0]]
  $region18: #{tpu_custom_call.1} parent=0
    _
  %s5 = ssub.s32 1, %s3
  %s6 = scalar_select 0, %s5, %s3
  $region1: #{tpu_custom_call.1} parent=0
    #allocation2 [shape = 'u8[4096]{0}', space=vmem, size = 0x1000, scoped, tag = 'output window, operand 0, single buffered']
    #allocation3 [shape = 's32[1]{0}', space=sflag, size = 0x4, scoped, tag = 'scoped memory for tpu_custom_call.1']
    %7 = vsyncpa [#allocation3], 0
    // Predicated region
    $region2: #{tpu_custom_call.1} parent=1 // pred_check
      _
    $region3: #{tpu_custom_call.1} parent=1 // pred_check_branch
      %9 = sbr.rel (0) target = $region5
    $region4: #{tpu_custom_call.1} parent=1 // pred_region
      _
    $region5: #{tpu_custom_call.1} parent=1 // pred_fallthru
      _
    // Predicated region
    $region6: #{tpu_custom_call.1} parent=1 // pred_check
      _
    $region7: #{tpu_custom_call.1} parent=1 // pred_check_branch
      %11 = sbr.rel (0) target = $region9
    $region8: #{tpu_custom_call.1} parent=1 // pred_region
      _
    $region9: #{tpu_custom_call.1} parent=1 // pred_fallthru
      _
    %v12 = vld [vmem:[%s0] sm:$0xff]
    %v13 = vlaneseq
    %v14 = vand.u32 %v13, 127
    %15 = vset.pattern.permute.xlu0 0
    %16 = vperm.xlu0 %15, %v12
    %v17 = vpop.permute.xlu0 %16
    %vm18 = vcmp.eq.s32.totalorder %v14, %v17
    %v19 = vsel %vm18, 1, 0
    %v20 = vcvt.s32.f32 %v19
    %v21 = vld [vmem:[%s1] sm:$0xff]
    %v22 = vld [vmem:[%s1 + $0x8] sm:$0xff]
    %v23 = vld [vmem:[%s1 + $0x10] sm:$0xff]
    %v24 = vld [vmem:[%s1 + $0x18] sm:$0xff]
    %v25 = vld [vmem:[%s1 + $0x20] sm:$0xff]
    %v26 = vld [vmem:[%s1 + $0x28] sm:$0xff]
    %v27 = vld [vmem:[%s1 + $0x30] sm:$0xff]
    %v28 = vld [vmem:[%s1 + $0x38] sm:$0xff]
    %v29 = vld [vmem:[%s1 + $0x40] sm:$0xff]
    %v30 = vld [vmem:[%s1 + $0x48] sm:$0xff]
    %v31 = vld [vmem:[%s1 + $0x50] sm:$0xff]
    %v32 = vld [vmem:[%s1 + $0x58] sm:$0xff]
    %v33 = vld [vmem:[%s1 + $0x60] sm:$0xff]
    %v34 = vld [vmem:[%s1 + $0x68] sm:$0xff]
    %v35 = vld [vmem:[%s1 + $0x70] sm:$0xff]
    %v36 = vld [vmem:[%s1 + $0x78] sm:$0xff]
    %37 = vmatprep.subr.mxu0 0.0
    %38 = vmatpush1.msra.mxu0 %v21
    %39 = vmatprep.subr.mxu0 0.0
    %40 = vmatpush1.msra.mxu0 %v22
    %41 = vmatprep.subr.mxu0 0.0
    %42 = vmatpush1.msra.mxu0 %v23
    %43 = vmatprep.subr.mxu0 0.0
    %44 = vmatpush1.msra.mxu0 %v24
    %45 = vmatprep.subr.mxu0 0.0
    %46 = vmatpush1.msra.mxu0 %v25
    %47 = vmatprep.subr.mxu0 0.0
    %48 = vmatpush1.msra.mxu0 %v26
    %49 = vmatprep.subr.mxu0 0.0
    %50 = vmatpush1.msra.mxu0 %v27
    %51 = vmatprep.subr.mxu0 0.0
    %52 = vmatpush1.msra.mxu0 %v28
    %53 = vmatprep.subr.mxu0 0.0
    %54 = vmatpush1.msra.mxu0 %v29
    %55 = vmatprep.subr.mxu0 0.0
    %56 = vmatpush1.msra.mxu0 %v30
    %57 = vmatprep.subr.mxu0 0.0
    %58 = vmatpush1.msra.mxu0 %v31
    %59 = vmatprep.subr.mxu0 0.0
    %60 = vmatpush1.msra.mxu0 %v32
    %61 = vmatprep.subr.mxu0 0.0
    %62 = vmatpush1.msra.mxu0 %v33
    %63 = vmatprep.subr.mxu0 0.0
    %64 = vmatpush1.msra.mxu0 %v34
    %65 = vmatprep.subr.mxu0 0.0
    %66 = vmatpush1.msra.mxu0 %v35
    %67 = vmatprep.subr.mxu0 0.0
    %68 = vmatpush1.msra.mxu0 %v36
    %69 = vmatprep.subr.mxu0 0.0
    %70 = vmatpush1.msra.mxu0 0.0
    %71 = vmatprep.subr.mxu0 0.0
    %72 = vmatpush1.msra.mxu0 0.0
    %73 = vmatprep.subr.mxu0 0.0
    %74 = vmatpush1.msra.mxu0 0.0
    %75 = vmatprep.subr.mxu0 0.0
    %76 = vmatpush1.msra.mxu0 0.0
    %77 = vmatprep.subr.mxu0 0.0
    %78 = vmatpush1.msra.mxu0 0.0
    %79 = vmatprep.subr.mxu0 0.0
    %80 = vmatpush1.msra.mxu0 0.0
    %81 = vmatprep.subr.mxu0 0.0
    %82 = vmatpush1.msra.mxu0 0.0
    %83 = vmatprep.subr.mxu0 0.0
    %84 = vmatpush1.msra.mxu0 0.0
    %85 = vmatprep.subr.mxu0 0.0
    %86 = vmatpush1.msra.mxu0 0.0
    %87 = vmatprep.subr.mxu0 0.0
    %88 = vmatpush1.msra.mxu0 0.0
    %89 = vmatprep.subr.mxu0 0.0
    %90 = vmatpush1.msra.mxu0 0.0
    %91 = vmatprep.subr.mxu0 0.0
    %92 = vmatpush1.msra.mxu0 0.0
    %93 = vmatprep.subr.mxu0 0.0
    %94 = vmatpush1.msra.mxu0 0.0
    %95 = vmatprep.subr.mxu0 0.0
    %96 = vmatpush1.msra.mxu0 0.0
    %97 = vmatprep.subr.mxu0 0.0
    %98 = vmatpush1.msra.mxu0 0.0
    %99 = vmatprep.subr.mxu0 0.0
    %100 = vmatpush1.msra.mxu0 0.0
    %101 = vmatprep.mubr.f32.mxu0 0.0
    %102 = vmatmul.mubr.f32.gmra.mrb[0].mxu0 %v20
    %v103 = vpop.f32.mrb[0].mxu0
    %v104 = vadd.f32 0.0, %v103
    %v105 = vpop.f32.mrb[0].mxu0
    %106 = vdwg.mxu0
    %107 = vset.pattern.permute.xlu0 1
    %108 = vperm.xlu0 %107, %v12
    %v109 = vpop.permute.xlu0 %108
    %vm110 = vcmp.eq.s32.totalorder %v14, %v109
    %v111 = vsel %vm110, 1, 0
    %v112 = vcvt.s32.f32 %v111
    %113 = vmatprep.subr.mxu0 0.0
    %114 = vmatpush1.msra.mxu0 %v21
    %115 = vmatprep.subr.mxu0 0.0
    %116 = vmatpush1.msra.mxu0 %v22
    %117 = vmatprep.subr.mxu0 0.0
    %118 = vmatpush1.msra.mxu0 %v23
    %119 = vmatprep.subr.mxu0 0.0
    %120 = vmatpush1.msra.mxu0 %v24
    %121 = vmatprep.subr.mxu0 0.0
    %122 = vmatpush1.msra.mxu0 %v25
    %123 = vmatprep.subr.mxu0 0.0
    %124 = vmatpush1.msra.mxu0 %v26
    %125 = vmatprep.subr.mxu0 0.0
    %126 = vmatpush1.msra.mxu0 %v27
    %127 = vmatprep.subr.mxu0 0.0
    %128 = vmatpush1.msra.mxu0 %v28
    %129 = vmatprep.subr.mxu0 0.0
    %130 = vmatpush1.msra.mxu0 %v29
    %131 = vmatprep.subr.mxu0 0.0
    %132 = vmatpush1.msra.mxu0 %v30
    %133 = vmatprep.subr.mxu0 0.0
    %134 = vmatpush1.msra.mxu0 %v31
    %135 = vmatprep.subr.mxu0 0.0
    %136 = vmatpush1.msra.mxu0 %v32
    %137 = vmatprep.subr.mxu0 0.0
    %138 = vmatpush1.msra.mxu0 %v33
    %139 = vmatprep.subr.mxu0 0.0
    %140 = vmatpush1.msra.mxu0 %v34
    %141 = vmatprep.subr.mxu0 0.0
    %142 = vmatpush1.msra.mxu0 %v35
    %143 = vmatprep.subr.mxu0 0.0
    %144 = vmatpush1.msra.mxu0 %v36
    %145 = vmatprep.subr.mxu0 0.0
    %146 = vmatpush1.msra.mxu0 0.0
    %147 = vmatprep.subr.mxu0 0.0
    %148 = vmatpush1.msra.mxu0 0.0
    %149 = vmatprep.subr.mxu0 0.0
    %150 = vmatpush1.msra.mxu0 0.0
    %151 = vmatprep.subr.mxu0 0.0
    %152 = vmatpush1.msra.mxu0 0.0
    %153 = vmatprep.subr.mxu0 0.0
    %154 = vmatpush1.msra.mxu0 0.0
    %155 = vmatprep.subr.mxu0 0.0
    %156 = vmatpush1.msra.mxu0 0.0
    %157 = vmatprep.subr.mxu0 0.0
    %158 = vmatpush1.msra.mxu0 0.0
    %159 = vmatprep.subr.mxu0 0.0
    %160 = vmatpush1.msra.mxu0 0.0
    %161 = vmatprep.subr.mxu0 0.0
    %162 = vmatpush1.msra.mxu0 0.0
    %163 = vmatprep.subr.mxu0 0.0
    %164 = vmatpush1.msra.mxu0 0.0
    %165 = vmatprep.subr.mxu0 0.0
    %166 = vmatpush1.msra.mxu0 0.0
    %167 = vmatprep.subr.mxu0 0.0
    %168 = vmatpush1.msra.mxu0 0.0
    %169 = vmatprep.subr.mxu0 0.0
    %170 = vmatpush1.msra.mxu0 0.0
    %171 = vmatprep.subr.mxu0 0.0
    %172 = vmatpush1.msra.mxu0 0.0
    %173 = vmatprep.subr.mxu0 0.0
    %174 = vmatpush1.msra.mxu0 0.0
    %175 = vmatprep.subr.mxu0 0.0
    %176 = vmatpush1.msra.mxu0 0.0
    %177 = vmatprep.mubr.f32.mxu0 0.0
    %178 = vmatmul.mubr.f32.gmra.mrb[0].mxu0 %v112
    %v179 = vpop.f32.mrb[0].mxu0
    %v180 = vadd.f32 0.0, %v179
    %v181 = vpop.f32.mrb[0].mxu0
    %182 = vdwg.mxu0
    %183 = vset.pattern.permute.xlu0 2
    %184 = vperm.xlu0 %183, %v12
    %v185 = vpop.permute.xlu0 %184
    %vm186 = vcmp.eq.s32.totalorder %v14, %v185
    %v187 = vsel %vm186, 1, 0
    %v188 = vcvt.s32.f32 %v187
    %189 = vmatprep.subr.mxu0 0.0
    %190 = vmatpush1.msra.mxu0 %v21
    %191 = vmatprep.subr.mxu0 0.0
    %192 = vmatpush1.msra.mxu0 %v22
    %193 = vmatprep.subr.mxu0 0.0
    %194 = vmatpush1.msra.mxu0 %v23
    %195 = vmatprep.subr.mxu0 0.0
    %196 = vmatpush1.msra.mxu0 %v24
    %197 = vmatprep.subr.mxu0 0.0
    %198 = vmatpush1.msra.mxu0 %v25
    %199 = vmatprep.subr.mxu0 0.0
    %200 = vmatpush1.msra.mxu0 %v26
    %201 = vmatprep.subr.mxu0 0.0
    %202 = vmatpush1.msra.mxu0 %v27
    %203 = vmatprep.subr.mxu0 0.0
    %204 = vmatpush1.msra.mxu0 %v28
    %205 = vmatprep.subr.mxu0 0.0
    %206 = vmatpush1.msra.mxu0 %v29
    %207 = vmatprep.subr.mxu0 0.0
    %208 = vmatpush1.msra.mxu0 %v30
    %209 = vmatprep.subr.mxu0 0.0
    %210 = vmatpush1.msra.mxu0 %v31
    %211 = vmatprep.subr.mxu0 0.0
    %212 = vmatpush1.msra.mxu0 %v32
    %213 = vmatprep.subr.mxu0 0.0
    %214 = vmatpush1.msra.mxu0 %v33
    %215 = vmatprep.subr.mxu0 0.0
    %216 = vmatpush1.msra.mxu0 %v34
    %217 = vmatprep.subr.mxu0 0.0
    %218 = vmatpush1.msra.mxu0 %v35
    %219 = vmatprep.subr.mxu0 0.0
    %220 = vmatpush1.msra.mxu0 %v36
    %221 = vmatprep.subr.mxu0 0.0
    %222 = vmatpush1.msra.mxu0 0.0
    %223 = vmatprep.subr.mxu0 0.0
    %224 = vmatpush1.msra.mxu0 0.0
    %225 = vmatprep.subr.mxu0 0.0
    %226 = vmatpush1.msra.mxu0 0.0
    %227 = vmatprep.subr.mxu0 0.0
    %228 = vmatpush1.msra.mxu0 0.0
    %229 = vmatprep.subr.mxu0 0.0
    %230 = vmatpush1.msra.mxu0 0.0
    %231 = vmatprep.subr.mxu0 0.0
    %232 = vmatpush1.msra.mxu0 0.0
    %233 = vmatprep.subr.mxu0 0.0
    %234 = vmatpush1.msra.mxu0 0.0
    %235 = vmatprep.subr.mxu0 0.0
    %236 = vmatpush1.msra.mxu0 0.0
    %237 = vmatprep.subr.mxu0 0.0
    %238 = vmatpush1.msra.mxu0 0.0
    %239 = vmatprep.subr.mxu0 0.0
    %240 = vmatpush1.msra.mxu0 0.0
    %241 = vmatprep.subr.mxu0 0.0
    %242 = vmatpush1.msra.mxu0 0.0
    %243 = vmatprep.subr.mxu0 0.0
    %244 = vmatpush1.msra.mxu0 0.0
    %245 = vmatprep.subr.mxu0 0.0
    %246 = vmatpush1.msra.mxu0 0.0
    %247 = vmatprep.subr.mxu0 0.0
    %248 = vmatpush1.msra.mxu0 0.0
    %249 = vmatprep.subr.mxu0 0.0
    %250 = vmatpush1.msra.mxu0 0.0
    %251 = vmatprep.subr.mxu0 0.0
    %252 = vmatpush1.msra.mxu0 0.0
    %253 = vmatprep.mubr.f32.mxu0 0.0
    %254 = vmatmul.mubr.f32.gmra.mrb[0].mxu0 %v188
    %v255 = vpop.f32.mrb[0].mxu0
    %v256 = vadd.f32 0.0, %v255
    %v257 = vpop.f32.mrb[0].mxu0
    %258 = vdwg.mxu0
    %259 = vset.pattern.permute.xlu0 3
    %260 = vperm.xlu0 %259, %v12
    %v261 = vpop.permute.xlu0 %260
    %vm262 = vcmp.eq.s32.totalorder %v14, %v261
    %v263 = vsel %vm262, 1, 0
    %v264 = vcvt.s32.f32 %v263
    %265 = vmatprep.subr.mxu0 0.0
    %266 = vmatpush1.msra.mxu0 %v21
    %267 = vmatprep.subr.mxu0 0.0
    %268 = vmatpush1.msra.mxu0 %v22
    %269 = vmatprep.subr.mxu0 0.0
    %270 = vmatpush1.msra.mxu0 %v23
    %271 = vmatprep.subr.mxu0 0.0
    %272 = vmatpush1.msra.mxu0 %v24
    %273 = vmatprep.subr.mxu0 0.0
    %274 = vmatpush1.msra.mxu0 %v25
    %275 = vmatprep.subr.mxu0 0.0
    %276 = vmatpush1.msra.mxu0 %v26
    %277 = vmatprep.subr.mxu0 0.0
    %278 = vmatpush1.msra.mxu0 %v27
    %279 = vmatprep.subr.mxu0 0.0
    %280 = vmatpush1.msra.mxu0 %v28
    %281 = vmatprep.subr.mxu0 0.0
    %282 = vmatpush1.msra.mxu0 %v29
    %283 = vmatprep.subr.mxu0 0.0
    %284 = vmatpush1.msra.mxu0 %v30
    %285 = vmatprep.subr.mxu0 0.0
    %286 = vmatpush1.msra.mxu0 %v31
    %287 = vmatprep.subr.mxu0 0.0
    %288 = vmatpush1.msra.mxu0 %v32
    %289 = vmatprep.subr.mxu0 0.0
    %290 = vmatpush1.msra.mxu0 %v33
    %291 = vmatprep.subr.mxu0 0.0
    %292 = vmatpush1.msra.mxu0 %v34
    %293 = vmatprep.subr.mxu0 0.0
    %294 = vmatpush1.msra.mxu0 %v35
    %295 = vmatprep.subr.mxu0 0.0
    %296 = vmatpush1.msra.mxu0 %v36
    %297 = vmatprep.subr.mxu0 0.0
    %298 = vmatpush1.msra.mxu0 0.0
    %299 = vmatprep.subr.mxu0 0.0
    %300 = vmatpush1.msra.mxu0 0.0
    %301 = vmatprep.subr.mxu0 0.0
    %302 = vmatpush1.msra.mxu0 0.0
    %303 = vmatprep.subr.mxu0 0.0
    %304 = vmatpush1.msra.mxu0 0.0
    %305 = vmatprep.subr.mxu0 0.0
    %306 = vmatpush1.msra.mxu0 0.0
    %307 = vmatprep.subr.mxu0 0.0
    %308 = vmatpush1.msra.mxu0 0.0
    %309 = vmatprep.subr.mxu0 0.0
    %310 = vmatpush1.msra.mxu0 0.0
    %311 = vmatprep.subr.mxu0 0.0
    %312 = vmatpush1.msra.mxu0 0.0
    %313 = vmatprep.subr.mxu0 0.0
    %314 = vmatpush1.msra.mxu0 0.0
    %315 = vmatprep.subr.mxu0 0.0
    %316 = vmatpush1.msra.mxu0 0.0
    %317 = vmatprep.subr.mxu0 0.0
    %318 = vmatpush1.msra.mxu0 0.0
    %319 = vmatprep.subr.mxu0 0.0
    %320 = vmatpush1.msra.mxu0 0.0
    %321 = vmatprep.subr.mxu0 0.0
    %322 = vmatpush1.msra.mxu0 0.0
    %323 = vmatprep.subr.mxu0 0.0
    %324 = vmatpush1.msra.mxu0 0.0
    %325 = vmatprep.subr.mxu0 0.0
    %326 = vmatpush1.msra.mxu0 0.0
    %327 = vmatprep.subr.mxu0 0.0
    %328 = vmatpush1.msra.mxu0 0.0
    %329 = vmatprep.mubr.f32.mxu0 0.0
    %330 = vmatmul.mubr.f32.gmra.mrb[0].mxu0 %v264
    %v331 = vpop.f32.mrb[0].mxu0
    %v332 = vadd.f32 0.0, %v331
    %v333 = vpop.f32.mrb[0].mxu0
    %334 = vdwg.mxu0
    %336 = vrot.lane.b32.xlu0 %v180, 32
    %v337 = vpop.permute.xlu0 %336
    %340 = vrot.lane.b32.xlu0 %v256, 64
    %v341 = vpop.permute.xlu0 %340
    %344 = vrot.lane.b32.xlu0 %v332, 96
    %v345 = vpop.permute.xlu0 %344
    %vm347 = vcmask 261120
    %v348 = vsel %vm347, %v104, %v337
    %vm349 = vcmask 523264
    %v350 = vsel %vm349, %v348, %v341
    %vm351 = vcmask 785408
    %v352 = vsel %vm351, %v350, %v345
    %v353 = vmul.f32 %v352, 5.656854
    %354 = vst [vmem:[#allocation2] sm:$0xff] %v353
    // Predicated region
    $region10: #{tpu_custom_call.1} parent=1 // pred_check
      _
    $region11: #{tpu_custom_call.1} parent=1 // pred_check_branch
      %356 = sbr.rel (0) target = $region13
    $region12: #{tpu_custom_call.1} parent=1 // pred_region
      %s358 = ssub.s32 128, 128
      %359 = vsyncadd [#allocation3], %s358
      %s361 = sshll.u32 [#allocation2], 4
      %s362 = int_to_ptr.vmem [resolvable:$true] %s361
      %364 = dma.vmem_to_hbm [thread:$0]  %s362, 128, %s2, [#allocation3]
    $region13: #{tpu_custom_call.1} parent=1 // pred_fallthru
      _
    // Predicated region
    $region14: #{tpu_custom_call.1} parent=1 // pred_check
      _
    $region15: #{tpu_custom_call.1} parent=1 // pred_check_branch
      %366 = sbr.rel (0) target = $region17
    $region16: #{tpu_custom_call.1} parent=1 // pred_region
      %367 = dma.done [#allocation3], 128
    $region17: #{tpu_custom_call.1} parent=1 // pred_fallthru
      _
    %368 = vsyncpa [#allocation3], 1

// kernel: tpu_custom_call.1
$region0: #{tpu_custom_call.1}
  #allocation0 [shape = 'u32[]', space=smem, size = 0x4, offset = 0x4, fixed_abs, tag = 'smem constant byte address 0x4 - core index']
  #allocation1 [shape = 'u32[144,128]{1,0:T(1,128)}', space=vmem, size = 0x12000, scoped, tag = 'internal scratch']
  %s0 = inlined_call_operand.vmem [shape: s32[8,4], index: 0, kind: input, shape index: {}]
  %s1 = inlined_call_operand.vmem [shape: f32[128,32], index: 1, kind: input, shape index: {}]
  %s2 = inlined_call_operand.hbm [shape: f32[8,128], index: 2, kind: output, shape index: {}]
  %s3 = sld [smem:[#allocation0]]
  $region18: #{tpu_custom_call.1} parent=0
    _
  %s5 = ssub.s32 1, %s3
  %s6 = scalar_select 0, %s5, %s3
  $region1: #{tpu_custom_call.1} parent=0
    #allocation2 [shape = 'u8[4096]{0}', space=vmem, size = 0x1000, scoped, tag = 'output window, operand 0, single buffered']
    #allocation3 [shape = 's32[1]{0}', space=sflag, size = 0x4, scoped, tag = 'scoped memory for tpu_custom_call.1']
    %7 = vsyncpa [#allocation3], 0
    // Predicated region
    $region2: #{tpu_custom_call.1} parent=1 // pred_check
      _
    $region3: #{tpu_custom_call.1} parent=1 // pred_check_branch
      %9 = sbr.rel (0) target = $region5
    $region4: #{tpu_custom_call.1} parent=1 // pred_region
      _
    $region5: #{tpu_custom_call.1} parent=1 // pred_fallthru
      _
    // Predicated region
    $region6: #{tpu_custom_call.1} parent=1 // pred_check
      _
    $region7: #{tpu_custom_call.1} parent=1 // pred_check_branch
      %11 = sbr.rel (0) target = $region9
    $region8: #{tpu_custom_call.1} parent=1 // pred_region
      _
    $region9: #{tpu_custom_call.1} parent=1 // pred_fallthru
      _
    %v12 = vld [vmem:[%s0] sm:$0xff]
    %v13 = vlaneseq
    %v14 = vand.u32 %v13, 127
    %15 = vset.pattern.permute.xlu0 0
    %16 = vperm.xlu0 %15, %v12
    %v17 = vpop.permute.xlu0 %16
    %vm18 = vcmp.eq.s32.totalorder %v14, %v17
    %v19 = vsel %vm18, 1, 0
    %v20 = vcvt.s32.f32 %v19
    %v21 = vld [vmem:[%s1] sm:$0xff]
    %v22 = vld [vmem:[%s1 + $0x8] sm:$0xff]
    %v23 = vld [vmem:[%s1 + $0x10] sm:$0xff]
    %v24 = vld [vmem:[%s1 + $0x18] sm:$0xff]
    %v25 = vld [vmem:[%s1 + $0x20] sm:$0xff]
    %v26 = vld [vmem:[%s1 + $0x28] sm:$0xff]
    %v27 = vld [vmem:[%s1 + $0x30] sm:$0xff]
    %v28 = vld [vmem:[%s1 + $0x38] sm:$0xff]
    %v29 = vld [vmem:[%s1 + $0x40] sm:$0xff]
    %v30 = vld [vmem:[%s1 + $0x48] sm:$0xff]
    %v31 = vld [vmem:[%s1 + $0x50] sm:$0xff]
    %v32 = vld [vmem:[%s1 + $0x58] sm:$0xff]
    %v33 = vld [vmem:[%s1 + $0x60] sm:$0xff]
    %v34 = vld [vmem:[%s1 + $0x68] sm:$0xff]
    %v35 = vld [vmem:[%s1 + $0x70] sm:$0xff]
    %v36 = vld [vmem:[%s1 + $0x78] sm:$0xff]
    %37 = vmatprep.subr.mxu0 0.0
    %38 = vmatpush1.msra.mxu0 %v21
    %39 = vmatprep.subr.mxu0 0.0
    %40 = vmatpush1.msra.mxu0 %v22
    %41 = vmatprep.subr.mxu0 0.0
    %42 = vmatpush1.msra.mxu0 %v23
    %43 = vmatprep.subr.mxu0 0.0
    %44 = vmatpush1.msra.mxu0 %v24
    %45 = vmatprep.subr.mxu0 0.0
    %46 = vmatpush1.msra.mxu0 %v25
    %47 = vmatprep.subr.mxu0 0.0
    %48 = vmatpush1.msra.mxu0 %v26
    %49 = vmatprep.subr.mxu0 0.0
    %50 = vmatpush1.msra.mxu0 %v27
    %51 = vmatprep.subr.mxu0 0.0
    %52 = vmatpush1.msra.mxu0 %v28
    %53 = vmatprep.subr.mxu0 0.0
    %54 = vmatpush1.msra.mxu0 %v29
    %55 = vmatprep.subr.mxu0 0.0
    %56 = vmatpush1.msra.mxu0 %v30
    %57 = vmatprep.subr.mxu0 0.0
    %58 = vmatpush1.msra.mxu0 %v31
    %59 = vmatprep.subr.mxu0 0.0
    %60 = vmatpush1.msra.mxu0 %v32
    %61 = vmatprep.subr.mxu0 0.0
    %62 = vmatpush1.msra.mxu0 %v33
    %63 = vmatprep.subr.mxu0 0.0
    %64 = vmatpush1.msra.mxu0 %v34
    %65 = vmatprep.subr.mxu0 0.0
    %66 = vmatpush1.msra.mxu0 %v35
    %67 = vmatprep.subr.mxu0 0.0
    %68 = vmatpush1.msra.mxu0 %v36
    %69 = vmatprep.subr.mxu0 0.0
    %70 = vmatpush1.msra.mxu0 0.0
    %71 = vmatprep.subr.mxu0 0.0
    %72 = vmatpush1.msra.mxu0 0.0
    %73 = vmatprep.subr.mxu0 0.0
    %74 = vmatpush1.msra.mxu0 0.0
    %75 = vmatprep.subr.mxu0 0.0
    %76 = vmatpush1.msra.mxu0 0.0
    %77 = vmatprep.subr.mxu0 0.0
    %78 = vmatpush1.msra.mxu0 0.0
    %79 = vmatprep.subr.mxu0 0.0
    %80 = vmatpush1.msra.mxu0 0.0
    %81 = vmatprep.subr.mxu0 0.0
    %82 = vmatpush1.msra.mxu0 0.0
    %83 = vmatprep.subr.mxu0 0.0
    %84 = vmatpush1.msra.mxu0 0.0
    %85 = vmatprep.subr.mxu0 0.0
    %86 = vmatpush1.msra.mxu0 0.0
    %87 = vmatprep.subr.mxu0 0.0
    %88 = vmatpush1.msra.mxu0 0.0
    %89 = vmatprep.subr.mxu0 0.0
    %90 = vmatpush1.msra.mxu0 0.0
    %91 = vmatprep.subr.mxu0 0.0
    %92 = vmatpush1.msra.mxu0 0.0
    %93 = vmatprep.subr.mxu0 0.0
    %94 = vmatpush1.msra.mxu0 0.0
    %95 = vmatprep.subr.mxu0 0.0
    %96 = vmatpush1.msra.mxu0 0.0
    %97 = vmatprep.subr.mxu0 0.0
    %98 = vmatpush1.msra.mxu0 0.0
    %99 = vmatprep.subr.mxu0 0.0
    %100 = vmatpush1.msra.mxu0 0.0
    %101 = vmatprep.mubr.f32.mxu0 0.0
    %102 = vmatmul.mubr.f32.gmra.mrb[0].mxu0 %v20
    %v103 = vpop.f32.mrb[0].mxu0
    %v104 = vadd.f32 0.0, %v103
    %v105 = vpop.f32.mrb[0].mxu0
    %106 = vdwg.mxu0
    %107 = vset.pattern.permute.xlu0 1
    %108 = vperm.xlu0 %107, %v12
    %v109 = vpop.permute.xlu0 %108
    %vm110 = vcmp.eq.s32.totalorder %v14, %v109
    %v111 = vsel %vm110, 1, 0
    %v112 = vcvt.s32.f32 %v111
    %113 = vmatprep.subr.mxu0 0.0
    %114 = vmatpush1.msra.mxu0 %v21
    %115 = vmatprep.subr.mxu0 0.0
    %116 = vmatpush1.msra.mxu0 %v22
    %117 = vmatprep.subr.mxu0 0.0
    %118 = vmatpush1.msra.mxu0 %v23
    %119 = vmatprep.subr.mxu0 0.0
    %120 = vmatpush1.msra.mxu0 %v24
    %121 = vmatprep.subr.mxu0 0.0
    %122 = vmatpush1.msra.mxu0 %v25
    %123 = vmatprep.subr.mxu0 0.0
    %124 = vmatpush1.msra.mxu0 %v26
    %125 = vmatprep.subr.mxu0 0.0
    %126 = vmatpush1.msra.mxu0 %v27
    %127 = vmatprep.subr.mxu0 0.0
    %128 = vmatpush1.msra.mxu0 %v28
    %129 = vmatprep.subr.mxu0 0.0
    %130 = vmatpush1.msra.mxu0 %v29
    %131 = vmatprep.subr.mxu0 0.0
    %132 = vmatpush1.msra.mxu0 %v30
    %133 = vmatprep.subr.mxu0 0.0
    %134 = vmatpush1.msra.mxu0 %v31
    %135 = vmatprep.subr.mxu0 0.0
    %136 = vmatpush1.msra.mxu0 %v32
    %137 = vmatprep.subr.mxu0 0.0
    %138 = vmatpush1.msra.mxu0 %v33
    %139 = vmatprep.subr.mxu0 0.0
    %140 = vmatpush1.msra.mxu0 %v34
    %141 = vmatprep.subr.mxu0 0.0
    %142 = vmatpush1.msra.mxu0 %v35
    %143 = vmatprep.subr.mxu0 0.0
    %144 = vmatpush1.msra.mxu0 %v36
    %145 = vmatprep.subr.mxu0 0.0
    %146 = vmatpush1.msra.mxu0 0.0
    %147 = vmatprep.subr.mxu0 0.0
    %148 = vmatpush1.msra.mxu0 0.0
    %149 = vmatprep.subr.mxu0 0.0
    %150 = vmatpush1.msra.mxu0 0.0
    %151 = vmatprep.subr.mxu0 0.0
    %152 = vmatpush1.msra.mxu0 0.0
    %153 = vmatprep.subr.mxu0 0.0
    %154 = vmatpush1.msra.mxu0 0.0
    %155 = vmatprep.subr.mxu0 0.0
    %156 = vmatpush1.msra.mxu0 0.0
    %157 = vmatprep.subr.mxu0 0.0
    %158 = vmatpush1.msra.mxu0 0.0
    %159 = vmatprep.subr.mxu0 0.0
    %160 = vmatpush1.msra.mxu0 0.0
    %161 = vmatprep.subr.mxu0 0.0
    %162 = vmatpush1.msra.mxu0 0.0
    %163 = vmatprep.subr.mxu0 0.0
    %164 = vmatpush1.msra.mxu0 0.0
    %165 = vmatprep.subr.mxu0 0.0
    %166 = vmatpush1.msra.mxu0 0.0
    %167 = vmatprep.subr.mxu0 0.0
    %168 = vmatpush1.msra.mxu0 0.0
    %169 = vmatprep.subr.mxu0 0.0
    %170 = vmatpush1.msra.mxu0 0.0
    %171 = vmatprep.subr.mxu0 0.0
    %172 = vmatpush1.msra.mxu0 0.0
    %173 = vmatprep.subr.mxu0 0.0
    %174 = vmatpush1.msra.mxu0 0.0
    %175 = vmatprep.subr.mxu0 0.0
    %176 = vmatpush1.msra.mxu0 0.0
    %177 = vmatprep.mubr.f32.mxu0 0.0
    %178 = vmatmul.mubr.f32.gmra.mrb[0].mxu0 %v112
    %v179 = vpop.f32.mrb[0].mxu0
    %v180 = vadd.f32 0.0, %v179
    %v181 = vpop.f32.mrb[0].mxu0
    %182 = vdwg.mxu0
    %183 = vset.pattern.permute.xlu0 2
    %184 = vperm.xlu0 %183, %v12
    %v185 = vpop.permute.xlu0 %184
    %vm186 = vcmp.eq.s32.totalorder %v14, %v185
    %v187 = vsel %vm186, 1, 0
    %v188 = vcvt.s32.f32 %v187
    %189 = vmatprep.subr.mxu0 0.0
    %190 = vmatpush1.msra.mxu0 %v21
    %191 = vmatprep.subr.mxu0 0.0
    %192 = vmatpush1.msra.mxu0 %v22
    %193 = vmatprep.subr.mxu0 0.0
    %194 = vmatpush1.msra.mxu0 %v23
    %195 = vmatprep.subr.mxu0 0.0
    %196 = vmatpush1.msra.mxu0 %v24
    %197 = vmatprep.subr.mxu0 0.0
    %198 = vmatpush1.msra.mxu0 %v25
    %199 = vmatprep.subr.mxu0 0.0
    %200 = vmatpush1.msra.mxu0 %v26
    %201 = vmatprep.subr.mxu0 0.0
    %202 = vmatpush1.msra.mxu0 %v27
    %203 = vmatprep.subr.mxu0 0.0
    %204 = vmatpush1.msra.mxu0 %v28
    %205 = vmatprep.subr.mxu0 0.0
    %206 = vmatpush1.msra.mxu0 %v29
    %207 = vmatprep.subr.mxu0 0.0
    %208 = vmatpush1.msra.mxu0 %v30
    %209 = vmatprep.subr.mxu0 0.0
    %210 = vmatpush1.msra.mxu0 %v31
    %211 = vmatprep.subr.mxu0 0.0
    %212 = vmatpush1.msra.mxu0 %v32
    %213 = vmatprep.subr.mxu0 0.0
    %214 = vmatpush1.msra.mxu0 %v33
    %215 = vmatprep.subr.mxu0 0.0
    %216 = vmatpush1.msra.mxu0 %v34
    %217 = vmatprep.subr.mxu0 0.0
    %218 = vmatpush1.msra.mxu0 %v35
    %219 = vmatprep.subr.mxu0 0.0
    %220 = vmatpush1.msra.mxu0 %v36
    %221 = vmatprep.subr.mxu0 0.0
    %222 = vmatpush1.msra.mxu0 0.0
    %223 = vmatprep.subr.mxu0 0.0
    %224 = vmatpush1.msra.mxu0 0.0
    %225 = vmatprep.subr.mxu0 0.0
    %226 = vmatpush1.msra.mxu0 0.0
    %227 = vmatprep.subr.mxu0 0.0
    %228 = vmatpush1.msra.mxu0 0.0
    %229 = vmatprep.subr.mxu0 0.0
    %230 = vmatpush1.msra.mxu0 0.0
    %231 = vmatprep.subr.mxu0 0.0
    %232 = vmatpush1.msra.mxu0 0.0
    %233 = vmatprep.subr.mxu0 0.0
    %234 = vmatpush1.msra.mxu0 0.0
    %235 = vmatprep.subr.mxu0 0.0
    %236 = vmatpush1.msra.mxu0 0.0
    %237 = vmatprep.subr.mxu0 0.0
    %238 = vmatpush1.msra.mxu0 0.0
    %239 = vmatprep.subr.mxu0 0.0
    %240 = vmatpush1.msra.mxu0 0.0
    %241 = vmatprep.subr.mxu0 0.0
    %242 = vmatpush1.msra.mxu0 0.0
    %243 = vmatprep.subr.mxu0 0.0
    %244 = vmatpush1.msra.mxu0 0.0
    %245 = vmatprep.subr.mxu0 0.0
    %246 = vmatpush1.msra.mxu0 0.0
    %247 = vmatprep.subr.mxu0 0.0
    %248 = vmatpush1.msra.mxu0 0.0
    %249 = vmatprep.subr.mxu0 0.0
    %250 = vmatpush1.msra.mxu0 0.0
    %251 = vmatprep.subr.mxu0 0.0
    %252 = vmatpush1.msra.mxu0 0.0
    %253 = vmatprep.mubr.f32.mxu0 0.0
    %254 = vmatmul.mubr.f32.gmra.mrb[0].mxu0 %v188
    %v255 = vpop.f32.mrb[0].mxu0
    %v256 = vadd.f32 0.0, %v255
    %v257 = vpop.f32.mrb[0].mxu0
    %258 = vdwg.mxu0
    %259 = vset.pattern.permute.xlu0 3
    %260 = vperm.xlu0 %259, %v12
    %v261 = vpop.permute.xlu0 %260
    %vm262 = vcmp.eq.s32.totalorder %v14, %v261
    %v263 = vsel %vm262, 1, 0
    %v264 = vcvt.s32.f32 %v263
    %265 = vmatprep.subr.mxu0 0.0
    %266 = vmatpush1.msra.mxu0 %v21
    %267 = vmatprep.subr.mxu0 0.0
    %268 = vmatpush1.msra.mxu0 %v22
    %269 = vmatprep.subr.mxu0 0.0
    %270 = vmatpush1.msra.mxu0 %v23
    %271 = vmatprep.subr.mxu0 0.0
    %272 = vmatpush1.msra.mxu0 %v24
    %273 = vmatprep.subr.mxu0 0.0
    %274 = vmatpush1.msra.mxu0 %v25
    %275 = vmatprep.subr.mxu0 0.0
    %276 = vmatpush1.msra.mxu0 %v26
    %277 = vmatprep.subr.mxu0 0.0
    %278 = vmatpush1.msra.mxu0 %v27
    %279 = vmatprep.subr.mxu0 0.0
    %280 = vmatpush1.msra.mxu0 %v28
    %281 = vmatprep.subr.mxu0 0.0
    %282 = vmatpush1.msra.mxu0 %v29
    %283 = vmatprep.subr.mxu0 0.0
    %284 = vmatpush1.msra.mxu0 %v30
    %285 = vmatprep.subr.mxu0 0.0
    %286 = vmatpush1.msra.mxu0 %v31
    %287 = vmatprep.subr.mxu0 0.0
    %288 = vmatpush1.msra.mxu0 %v32
    %289 = vmatprep.subr.mxu0 0.0
    %290 = vmatpush1.msra.mxu0 %v33
    %291 = vmatprep.subr.mxu0 0.0
    %292 = vmatpush1.msra.mxu0 %v34
    %293 = vmatprep.subr.mxu0 0.0
    %294 = vmatpush1.msra.mxu0 %v35
    %295 = vmatprep.subr.mxu0 0.0
    %296 = vmatpush1.msra.mxu0 %v36
    %297 = vmatprep.subr.mxu0 0.0
    %298 = vmatpush1.msra.mxu0 0.0
    %299 = vmatprep.subr.mxu0 0.0
    %300 = vmatpush1.msra.mxu0 0.0
    %301 = vmatprep.subr.mxu0 0.0
    %302 = vmatpush1.msra.mxu0 0.0
    %303 = vmatprep.subr.mxu0 0.0
    %304 = vmatpush1.msra.mxu0 0.0
    %305 = vmatprep.subr.mxu0 0.0
    %306 = vmatpush1.msra.mxu0 0.0
    %307 = vmatprep.subr.mxu0 0.0
    %308 = vmatpush1.msra.mxu0 0.0
    %309 = vmatprep.subr.mxu0 0.0
    %310 = vmatpush1.msra.mxu0 0.0
    %311 = vmatprep.subr.mxu0 0.0
    %312 = vmatpush1.msra.mxu0 0.0
    %313 = vmatprep.subr.mxu0 0.0
    %314 = vmatpush1.msra.mxu0 0.0
    %315 = vmatprep.subr.mxu0 0.0
    %316 = vmatpush1.msra.mxu0 0.0
    %317 = vmatprep.subr.mxu0 0.0
    %318 = vmatpush1.msra.mxu0 0.0
    %319 = vmatprep.subr.mxu0 0.0
    %320 = vmatpush1.msra.mxu0 0.0
    %321 = vmatprep.subr.mxu0 0.0
    %322 = vmatpush1.msra.mxu0 0.0
    %323 = vmatprep.subr.mxu0 0.0
    %324 = vmatpush1.msra.mxu0 0.0
    %325 = vmatprep.subr.mxu0 0.0
    %326 = vmatpush1.msra.mxu0 0.0
    %327 = vmatprep.subr.mxu0 0.0
    %328 = vmatpush1.msra.mxu0 0.0
    %329 = vmatprep.mubr.f32.mxu0 0.0
    %330 = vmatmul.mubr.f32.gmra.mrb[0].mxu0 %v264
    %v331 = vpop.f32.mrb[0].mxu0
    %v332 = vadd.f32 0.0, %v331
    %v333 = vpop.f32.mrb[0].mxu0
    %334 = vdwg.mxu0
    %v335 = vmul.f32 %v104, 5.656854
    %vm336 = vcmask 261120
    %337 = vst.msk [vmem:[#allocation2] sm:$0xff] %vm336, %v335
    %v338 = vmul.f32 %v180, 5.656854
    %340 = vrot.lane.b32.xlu0 %v338, 32
    %v341 = vpop.permute.xlu0 %340
    %vm343 = vcmask 523520
    %344 = vst.msk [vmem:[#allocation2] sm:$0xff] %vm343, %v341
    %v345 = vmul.f32 %v256, 5.656854
    %347 = vrot.lane.b32.xlu0 %v345, 64
    %v348 = vpop.permute.xlu0 %347
    %vm350 = vcmask 785920
    %351 = vst.msk [vmem:[#allocation2] sm:$0xff] %vm350, %v348
    %v352 = vmul.f32 %v332, 5.656854
    %354 = vrot.lane.b32.xlu0 %v352, 96
    %v355 = vpop.permute.xlu0 %354
    %vm357 = vcmask 1048320
    %358 = vst.msk [vmem:[#allocation2] sm:$0xff] %vm357, %v355
    // Predicated region
    $region10: #{tpu_custom_call.1} parent=1 // pred_check
      _
    $region11: #{tpu_custom_call.1} parent=1 // pred_check_branch
      %360 = sbr.rel (0) target = $region13
    $region12: #{tpu_custom_call.1} parent=1 // pred_region
      %s362 = ssub.s32 128, 128
      %363 = vsyncadd [#allocation3], %s362
      %s365 = sshll.u32 [#allocation2], 4
      %s366 = int_to_ptr.vmem [resolvable:$true] %s365
      %368 = dma.vmem_to_hbm [thread:$0]  %s366, 128, %s2, [#allocation3]
    $region13: #{tpu_custom_call.1} parent=1 // pred_fallthru
      _
    // Predicated region
    $region14: #{tpu_custom_call.1} parent=1 // pred_check
      _
    $region15: #{tpu_custom_call.1} parent=1 // pred_check_branch
      %370 = sbr.rel (0) target = $region17
    $region16: #{tpu_custom_call.1} parent=1 // pred_region
      %371 = dma.done [#allocation3], 128
    $region17: #{tpu_custom_call.1} parent=1 // pred_fallthru
      _
    %372 = vsyncpa [#allocation3], 1

</llo_original>
